<compile_context>
chip_gen: v6e
topology: v6e:2x2x1
jax: 0.10.0
libtpu: 0.0.40
codegen_flags: <defaults>
</compile_context>

<pallas_src>
import jax
import jax.numpy as jnp
from jax.experimental import pallas as pl
from jax.experimental.pallas import tpu as pltpu


def _shift_lanes(v, s):
    """t[:, p] = v[:, p + s] if 0 <= p + s < v.shape[1] else 0   (s is a static int)."""
    if s == 0:
        return v
    n = v.shape[1]
    z = jnp.zeros((v.shape[0], abs(s)), v.dtype)
    if s > 0:
        return jnp.concatenate([v[:, s:], z], axis=1)
    return jnp.concatenate([z, v[:, : n + s]], axis=1)


def _make_doubleconv_kernel(H, W, Cin, Cout, Bt, eps=1e-5):
    rows = H * W

    def kernel(x_ref, w1_ref, a1_ref, w2_ref, a2_ref, o_ref):
        # Column-edge masks (1, rows). The zero-filled lane shift already zeroes positions
        # whose source row falls off the top/bottom of the image, so only the left/right
        # image edges (column wrap within a row) need explicit masking.
        col = jax.lax.broadcasted_iota(jnp.int32, (1, rows), 1) % W
        has_left = col >= 1            # valid when the tap reads column x-1
        has_right = col <= W - 2       # valid when the tap reads column x+1

        def im2col(src):
            # src: (C, rows) f32  ->  (9*C, rows) f32, K ordered (kh, kw, c).
            pieces = []
            for di in range(3):
                for dj in range(3):
                    oi, oj = di - 1, dj - 1
                    t = _shift_lanes(src, oi * W + oj)
                    if oj == -1:
                        t = jnp.where(has_left, t, jnp.zeros_like(t))
                    elif oj == 1:
                        t = jnp.where(has_right, t, jnp.zeros_like(t))
                    pieces.append(t)
            return jnp.concatenate(pieces, axis=0)

        def conv3x3(srcs, w_ref):
            # srcs: Bt arrays (C, rows) f32 -> (Cout, Bt*rows) f32.
            # One wide-K MXU matmul; the batch tile rides the lane (free) dim.
            if len(srcs) == 1:
                patches = im2col(srcs[0])
            else:
                patches = jnp.concatenate([im2col(s) for s in srcs], axis=1)
            return jnp.dot(w_ref[...], patches.astype(jnp.bfloat16),
                           preferred_element_type=jnp.float32)

        def inorm_prelu(h_s, a_ref):
            # InstanceNorm2d (affine=False, biased var, eps) over the spatial (lane) axis of
            # ONE sample, then single-parameter PReLU. All f32.
            mean = jnp.mean(h_s, axis=1, keepdims=True)
            c = h_s - mean
            var = jnp.mean(c * c, axis=1, keepdims=True)
            y = c * jax.lax.rsqrt(var + eps)
            return jnp.where(y > 0, y, a_ref[...] * y)

        # Stage 1: conv1 -> InstanceNorm -> PReLU.  (Conv bias omitted: it is exactly
        # removed by the InstanceNorm mean subtraction that follows.)
        h1 = conv3x3([x_ref[s] for s in range(Bt)], w1_ref)                 # (Cout, Bt*rows)
        h1 = [inorm_prelu(h1[:, s * rows:(s + 1) * rows], a1_ref) for s in range(Bt)]

        # Stage 2: conv2 -> InstanceNorm -> PReLU, stored lane-dense as (Cout, rows) slabs.
        h2 = conv3x3(h1, w2_ref)                                            # (Cout, Bt*rows)
        for s in range(Bt):
            y = inorm_prelu(h2[:, s * rows:(s + 1) * rows], a2_ref)
            o_ref[pl.ds(s * Cout, Cout), :] = y.astype(o_ref.dtype)

    return kernel


def _pick_batch_tile(N, max_bt=8):
    """Largest batch tile <= max_bt dividing N, preferring an EVEN grid-step count (v7x 2-TC)."""
    candidates = [bt for bt in range(1, min(N, max_bt) + 1) if N % bt == 0]
    even = [bt for bt in candidates if (N // bt) % 2 == 0]
    return max(even) if even else max(candidates)


def double_conv(x_nchw, params, *, batch_tile=None):
    """DoubleConv forward. x_nchw: (N, Cin, H, W) f32. Returns (N, Cout, H, W) f32."""
    N, Cin, H, W = x_nchw.shape
    w1, w2 = params["w1"], params["w2"]
    a1, a2 = params["a1"], params["a2"]
    Cout = w1.shape[0]
    assert w1.shape == (Cout, Cin, 3, 3) and w2.shape == (Cout, Cout, 3, 3)
    assert Cout % 8 == 0, "Cout must be a multiple of 8 (sublane-aligned output slabs)"

    Bt = batch_tile if batch_tile is not None else _pick_batch_tile(N)
    assert N % Bt == 0
    rows = H * W

    # Channel-major 2-D view of NCHW: a pure reshape, no transpose / extra HBM traffic.
    x2d = x_nchw.reshape(N, Cin, rows).astype(jnp.float32)

    # Conv weights as im2col matrices (Cout, 9*C) with K ordered (kh, kw, c); bf16 MXU
    # operands (accumulation stays f32 inside the kernel). Biases are intentionally not
    # passed: they are exactly cancelled by the following InstanceNorm.
    w1_mat = w1.transpose(0, 2, 3, 1).reshape(Cout, 9 * Cin).astype(jnp.bfloat16)
    w2_mat = w2.transpose(0, 2, 3, 1).reshape(Cout, 9 * Cout).astype(jnp.bfloat16)
    a1_v = jnp.asarray(a1, jnp.float32).reshape(1, 1)
    a2_v = jnp.asarray(a2, jnp.float32).reshape(1, 1)

    kernel = _make_doubleconv_kernel(H, W, Cin, Cout, Bt)

    out2d = pl.pallas_call(
        kernel,
        out_shape=jax.ShapeDtypeStruct((N * Cout, rows), jnp.float32),
        grid=(N // Bt,),  # Bt samples per step; weights stay resident across steps.
        in_specs=[
            pl.BlockSpec((Bt, Cin, rows), lambda n: (n, 0, 0)),
            pl.BlockSpec((Cout, 9 * Cin), lambda n: (0, 0)),
            pl.BlockSpec((1, 1), lambda n: (0, 0)),
            pl.BlockSpec((Cout, 9 * Cout), lambda n: (0, 0)),
            pl.BlockSpec((1, 1), lambda n: (0, 0)),
        ],
        out_specs=pl.BlockSpec((Bt * Cout, rows), lambda n: (n, 0)),
        compiler_params=pltpu.CompilerParams(
            dimension_semantics=("parallel",),
        ),
    )(x2d, w1_mat, a1_v, w2_mat, a2_v)

    # (N*Cout, rows) is already NCHW order: pure reshape back, no transpose.
    return out2d.reshape(N, Cout, H, W)


def ref_double_conv(x, params, eps=1e-5):
    """Pure-JAX f32 reference matching the PyTorch module (biases included)."""
    def conv(x, w, b):
        y = jax.lax.conv_general_dilated(
            x, w, window_strides=(1, 1), padding="SAME",
            dimension_numbers=("NCHW", "OIHW", "NCHW"),
            precision=jax.lax.Precision.HIGHEST)
        return y + b[None, :, None, None]

    def inorm_prelu(y, a):
        mean = y.mean(axis=(2, 3), keepdims=True)
        var = ((y - mean) ** 2).mean(axis=(2, 3), keepdims=True)
        yn = (y - mean) * jax.lax.rsqrt(var + eps)
        return jnp.where(yn > 0, yn, a * yn)

    h = inorm_prelu(conv(x, params["w1"], params["b1"]), params["a1"])
    return inorm_prelu(conv(h, params["w2"], params["b2"]), params["a2"])


def init_params(key, in_channels, out_channels):
    """Deterministic synthetic parameters matching DoubleConv's shapes (PyTorch layout)."""
    k1, k2, k3, k4 = jax.random.split(key, 4)
    w1 = 0.1 * jax.random.normal(k1, (out_channels, in_channels, 3, 3), jnp.float32)
    b1 = 0.05 * jax.random.normal(k2, (out_channels,), jnp.float32)
    w2 = 0.1 * jax.random.normal(k3, (out_channels, out_channels, 3, 3), jnp.float32)
    b2 = 0.05 * jax.random.normal(k4, (out_channels,), jnp.float32)
    a1 = jnp.float32(0.25)   # nn.PReLU() default init
    a2 = jnp.float32(0.25)
    return dict(w1=w1, b1=b1, a1=a1, w2=w2, b2=b2, a2=a2)


if __name__ == "__main__":
    key = jax.random.PRNGKey(0)
    kx, kp = jax.random.split(key)

    # Small shapes consistent with the module: batch=2, in_channels=4, 16x16, hidden=32.
    N, Cin, H, W = 2, 4, 16, 16
    Cout = 32
    x = jax.random.normal(kx, (N, Cin, H, W), jnp.float32)
    params = init_params(kp, Cin, Cout)

    out = jax.block_until_ready(double_conv(x, params))
    assert out.shape == (N, Cout, H, W), out.shape
    assert bool(jnp.all(jnp.isfinite(out)))

    # Loose tolerance: the kernel uses bf16 matmul operands (f32 accumulation).
    ref = jax.block_until_ready(ref_double_conv(x, params))
    max_err = float(jnp.max(jnp.abs(out - ref)))
    assert max_err < 0.2, f"max abs error vs f32 reference too large: {max_err}"

    print("KERNEL_OK")
</pallas_src>

<mosaic_0001>
module attributes {stable_mosaic.version = 11 : i64} {
  func.func @kernel(%arg0: i32, %arg1: memref<1x4x256xf32, #tpu.memory_space<vmem>>, %arg2: memref<32x36xbf16, #tpu.memory_space<vmem>>, %arg3: memref<1x1xf32, #tpu.memory_space<vmem>>, %arg4: memref<32x288xbf16, #tpu.memory_space<vmem>>, %arg5: memref<1x1xf32, #tpu.memory_space<vmem>>, %arg6: memref<32x256xf32, #tpu.memory_space<vmem>>) attributes {dimension_semantics = [#tpu.dimension_semantics<parallel>], iteration_bounds = array<i64: 2>, scalar_prefetch = 0 : i64, scratch_operands = 0 : i64, tpu.core_type = #tpu.core_type<tc>, window_params = [{transform_indices = @transform_0, window_bounds = array<i64: 1, 4, 256>}, {pipeline_mode = #tpu.pipeline_mode<synchronous>, transform_indices = @transform_1, window_bounds = array<i64: 32, 36>}, {pipeline_mode = #tpu.pipeline_mode<synchronous>, transform_indices = @transform_2, window_bounds = array<i64: 1, 1>}, {pipeline_mode = #tpu.pipeline_mode<synchronous>, transform_indices = @transform_3, window_bounds = array<i64: 32, 288>}, {pipeline_mode = #tpu.pipeline_mode<synchronous>, transform_indices = @transform_4, window_bounds = array<i64: 1, 1>}, {transform_indices = @transform_5, window_bounds = array<i64: 32, 256>}]} {
    %0 = tpu.iota {dimensions = array<i32: 1>} : vector<1x256xi32>
    %c16_i32 = arith.constant 16 : i32
    %c0_i32 = arith.constant 0 : i32
    %1 = arith.cmpi eq, %c16_i32, %c0_i32 : i32
    %c1_i32 = arith.constant 1 : i32
    %2 = arith.select %1, %c1_i32, %c16_i32 : i32
    %3 = vector.broadcast %2 : i32 to vector<1x256xi32>
    %4 = arith.remsi %0, %3 : vector<1x256xi32>
    %c0_i32_0 = arith.constant 0 : i32
    %5 = vector.broadcast %c0_i32_0 : i32 to vector<1x256xi32>
    %6 = arith.cmpi ne, %4, %5 : vector<1x256xi32>
    %c0_i32_1 = arith.constant 0 : i32
    %7 = vector.broadcast %c0_i32_1 : i32 to vector<1x256xi32>
    %8 = arith.cmpi slt, %4, %7 : vector<1x256xi32>
    %c0_i32_2 = arith.constant 0 : i32
    %9 = arith.cmpi slt, %2, %c0_i32_2 : i32
    %10 = vector.broadcast %9 : i1 to vector<1x256xi1>
    %11 = vector.broadcast %10 : vector<1x256xi1> to vector<1x256xi1>
    %12 = arith.xori %8, %11 : vector<1x256xi1>
    %13 = arith.andi %12, %6 : vector<1x256xi1>
    %14 = vector.broadcast %2 : i32 to vector<1x256xi32>
    %15 = arith.addi %4, %14 : vector<1x256xi32>
    %16 = arith.select %13, %15, %4 : vector<1x256xi1>, vector<1x256xi32>
    %c1_i32_3 = arith.constant 1 : i32
    %17 = vector.broadcast %c1_i32_3 : i32 to vector<1x256xi32>
    %18 = arith.cmpi sge, %16, %17 : vector<1x256xi32>
    %c14_i32 = arith.constant 14 : i32
    %19 = vector.broadcast %c14_i32 : i32 to vector<1x256xi32>
    %20 = arith.cmpi sle, %16, %19 : vector<1x256xi32>
    %c0 = arith.constant 0 : index
    %c0_4 = arith.constant 0 : index
    %c0_5 = arith.constant 0 : index
    %21 = vector.load %arg1[%c0, %c0_4, %c0_5] : memref<1x4x256xf32, #tpu.memory_space<vmem>>, vector<1x4x256xf32>
    %22 = vector.shape_cast %21 : vector<1x4x256xf32> to vector<4x256xf32>
    %cst = arith.constant 0.000000e+00 : f32
    %23 = vector.broadcast %cst : f32 to vector<4x17xf32>
    %24 = vector.extract_strided_slice %22 {offsets = [0, 0], sizes = [4, 239], strides = [1, 1]} : vector<4x256xf32> to vector<4x239xf32>
    %25 = tpu.concatenate %23, %24 in 1 : vector<4x17xf32>, vector<4x239xf32> -> vector<4x256xf32>
    %cst_6 = arith.constant 0.000000e+00 : f32
    %26 = vector.broadcast %cst_6 : f32 to vector<4x256xf32>
    %27 = vector.shape_cast %18 : vector<1x256xi1> to vector<1x256xi1>
    %28 = vector.broadcast %27 : vector<1x256xi1> to vector<4x256xi1>
    %29 = arith.select %28, %25, %26 : vector<4x256xi1>, vector<4x256xf32>
    %cst_7 = arith.constant 0.000000e+00 : f32
    %30 = vector.broadcast %cst_7 : f32 to vector<4x16xf32>
    %31 = vector.extract_strided_slice %22 {offsets = [0, 0], sizes = [4, 240], strides = [1, 1]} : vector<4x256xf32> to vector<4x240xf32>
    %32 = tpu.concatenate %30, %31 in 1 : vector<4x16xf32>, vector<4x240xf32> -> vector<4x256xf32>
    %cst_8 = arith.constant 0.000000e+00 : f32
    %33 = vector.broadcast %cst_8 : f32 to vector<4x15xf32>
    %34 = vector.extract_strided_slice %22 {offsets = [0, 0], sizes = [4, 241], strides = [1, 1]} : vector<4x256xf32> to vector<4x241xf32>
    %35 = tpu.concatenate %33, %34 in 1 : vector<4x15xf32>, vector<4x241xf32> -> vector<4x256xf32>
    %cst_9 = arith.constant 0.000000e+00 : f32
    %36 = vector.broadcast %cst_9 : f32 to vector<4x256xf32>
    %37 = vector.shape_cast %20 : vector<1x256xi1> to vector<1x256xi1>
    %38 = vector.broadcast %37 : vector<1x256xi1> to vector<4x256xi1>
    %39 = arith.select %38, %35, %36 : vector<4x256xi1>, vector<4x256xf32>
    %cst_10 = arith.constant 0.000000e+00 : f32
    %40 = vector.broadcast %cst_10 : f32 to vector<4x1xf32>
    %41 = vector.extract_strided_slice %22 {offsets = [0, 0], sizes = [4, 255], strides = [1, 1]} : vector<4x256xf32> to vector<4x255xf32>
    %42 = tpu.concatenate %40, %41 in 1 : vector<4x1xf32>, vector<4x255xf32> -> vector<4x256xf32>
    %cst_11 = arith.constant 0.000000e+00 : f32
    %43 = vector.broadcast %cst_11 : f32 to vector<4x256xf32>
    %44 = vector.shape_cast %18 : vector<1x256xi1> to vector<1x256xi1>
    %45 = vector.broadcast %44 : vector<1x256xi1> to vector<4x256xi1>
    %46 = arith.select %45, %42, %43 : vector<4x256xi1>, vector<4x256xf32>
    %cst_12 = arith.constant 0.000000e+00 : f32
    %47 = vector.broadcast %cst_12 : f32 to vector<4x1xf32>
    %48 = vector.extract_strided_slice %22 {offsets = [0, 1], sizes = [4, 255], strides = [1, 1]} : vector<4x256xf32> to vector<4x255xf32>
    %49 = tpu.concatenate %48, %47 in 1 : vector<4x255xf32>, vector<4x1xf32> -> vector<4x256xf32>
    %cst_13 = arith.constant 0.000000e+00 : f32
    %50 = vector.broadcast %cst_13 : f32 to vector<4x256xf32>
    %51 = vector.shape_cast %20 : vector<1x256xi1> to vector<1x256xi1>
    %52 = vector.broadcast %51 : vector<1x256xi1> to vector<4x256xi1>
    %53 = arith.select %52, %49, %50 : vector<4x256xi1>, vector<4x256xf32>
    %cst_14 = arith.constant 0.000000e+00 : f32
    %54 = vector.broadcast %cst_14 : f32 to vector<4x15xf32>
    %55 = vector.extract_strided_slice %22 {offsets = [0, 15], sizes = [4, 241], strides = [1, 1]} : vector<4x256xf32> to vector<4x241xf32>
    %56 = tpu.concatenate %55, %54 in 1 : vector<4x241xf32>, vector<4x15xf32> -> vector<4x256xf32>
    %cst_15 = arith.constant 0.000000e+00 : f32
    %57 = vector.broadcast %cst_15 : f32 to vector<4x256xf32>
    %58 = vector.shape_cast %18 : vector<1x256xi1> to vector<1x256xi1>
    %59 = vector.broadcast %58 : vector<1x256xi1> to vector<4x256xi1>
    %60 = arith.select %59, %56, %57 : vector<4x256xi1>, vector<4x256xf32>
    %cst_16 = arith.constant 0.000000e+00 : f32
    %61 = vector.broadcast %cst_16 : f32 to vector<4x16xf32>
    %62 = vector.extract_strided_slice %22 {offsets = [0, 16], sizes = [4, 240], strides = [1, 1]} : vector<4x256xf32> to vector<4x240xf32>
    %63 = tpu.concatenate %62, %61 in 1 : vector<4x240xf32>, vector<4x16xf32> -> vector<4x256xf32>
    %cst_17 = arith.constant 0.000000e+00 : f32
    %64 = vector.broadcast %cst_17 : f32 to vector<4x17xf32>
    %65 = vector.extract_strided_slice %22 {offsets = [0, 17], sizes = [4, 239], strides = [1, 1]} : vector<4x256xf32> to vector<4x239xf32>
    %66 = tpu.concatenate %65, %64 in 1 : vector<4x239xf32>, vector<4x17xf32> -> vector<4x256xf32>
    %cst_18 = arith.constant 0.000000e+00 : f32
    %67 = vector.broadcast %cst_18 : f32 to vector<4x256xf32>
    %68 = vector.shape_cast %20 : vector<1x256xi1> to vector<1x256xi1>
    %69 = vector.broadcast %68 : vector<1x256xi1> to vector<4x256xi1>
    %70 = arith.select %69, %66, %67 : vector<4x256xi1>, vector<4x256xf32>
    %71 = tpu.concatenate %29, %32, %39, %46, %22, %53, %60, %63, %70 in 0 : vector<4x256xf32>, vector<4x256xf32>, vector<4x256xf32>, vector<4x256xf32>, vector<4x256xf32>, vector<4x256xf32>, vector<4x256xf32>, vector<4x256xf32>, vector<4x256xf32> -> vector<36x256xf32>
    %c0_19 = arith.constant 0 : index
    %c0_20 = arith.constant 0 : index
    %72 = vector.load %arg2[%c0_19, %c0_20] : memref<32x36xbf16, #tpu.memory_space<vmem>>, vector<32x36xbf16>
    %73 = arith.truncf %71 : vector<36x256xf32> to vector<36x256xbf16>
    %cst_21 = arith.constant dense<0.000000e+00> : vector<32x256xf32>
    %74 = tpu.matmul %72, %73, %cst_21 {dimension_numbers = #tpu.dot_dimension_numbers<[1], [0], [0], [1], [0, 0, 1, 1], [], []>} : vector<32x36xbf16>, vector<36x256xbf16>, vector<32x256xf32> -> vector<32x256xf32>
    %cst_22 = arith.constant dense<0.000000e+00> : vector<32xf32>
    %75 = vector.multi_reduction <add>, %74, %cst_22 [1] : vector<32x256xf32> to vector<32xf32>
    %76 = vector.shape_cast %75 : vector<32xf32> to vector<32x1xf32>
    %cst_23 = arith.constant 2.560000e+02 : f32
    %77 = vector.broadcast %cst_23 : f32 to vector<32x1xf32>
    %78 = arith.divf %76, %77 : vector<32x1xf32>
    %79 = vector.broadcast %78 : vector<32x1xf32> to vector<32x256xf32>
    %80 = arith.subf %74, %79 : vector<32x256xf32>
    %81 = arith.mulf %80, %80 : vector<32x256xf32>
    %cst_24 = arith.constant dense<0.000000e+00> : vector<32xf32>
    %82 = vector.multi_reduction <add>, %81, %cst_24 [1] : vector<32x256xf32> to vector<32xf32>
    %83 = vector.shape_cast %82 : vector<32xf32> to vector<32x1xf32>
    %cst_25 = arith.constant 2.560000e+02 : f32
    %84 = vector.broadcast %cst_25 : f32 to vector<32x1xf32>
    %85 = arith.divf %83, %84 : vector<32x1xf32>
    %cst_26 = arith.constant 9.99999974E-6 : f32
    %86 = vector.broadcast %cst_26 : f32 to vector<32x1xf32>
    %87 = arith.addf %85, %86 : vector<32x1xf32>
    %88 = math.rsqrt %87 : vector<32x1xf32>
    %89 = vector.broadcast %88 : vector<32x1xf32> to vector<32x256xf32>
    %90 = arith.mulf %80, %89 : vector<32x256xf32>
    %cst_27 = arith.constant 0.000000e+00 : f32
    %91 = vector.broadcast %cst_27 : f32 to vector<32x256xf32>
    %92 = arith.cmpf ogt, %90, %91 : vector<32x256xf32>
    %c0_28 = arith.constant 0 : index
    %c0_29 = arith.constant 0 : index
    %93 = vector.load %arg3[%c0_28, %c0_29] : memref<1x1xf32, #tpu.memory_space<vmem>>, vector<1x1xf32>
    %94 = vector.broadcast %93 : vector<1x1xf32> to vector<32x256xf32>
    %95 = arith.mulf %94, %90 : vector<32x256xf32>
    %96 = arith.select %92, %90, %95 : vector<32x256xi1>, vector<32x256xf32>
    %cst_30 = arith.constant 0.000000e+00 : f32
    %97 = vector.broadcast %cst_30 : f32 to vector<32x17xf32>
    %98 = vector.extract_strided_slice %96 {offsets = [0, 0], sizes = [32, 239], strides = [1, 1]} : vector<32x256xf32> to vector<32x239xf32>
    %99 = tpu.concatenate %97, %98 in 1 : vector<32x17xf32>, vector<32x239xf32> -> vector<32x256xf32>
    %cst_31 = arith.constant 0.000000e+00 : f32
    %100 = vector.broadcast %cst_31 : f32 to vector<32x256xf32>
    %101 = vector.shape_cast %18 : vector<1x256xi1> to vector<1x256xi1>
    %102 = vector.broadcast %101 : vector<1x256xi1> to vector<32x256xi1>
    %103 = arith.select %102, %99, %100 : vector<32x256xi1>, vector<32x256xf32>
    %cst_32 = arith.constant 0.000000e+00 : f32
    %104 = vector.broadcast %cst_32 : f32 to vector<32x16xf32>
    %105 = vector.extract_strided_slice %96 {offsets = [0, 0], sizes = [32, 240], strides = [1, 1]} : vector<32x256xf32> to vector<32x240xf32>
    %106 = tpu.concatenate %104, %105 in 1 : vector<32x16xf32>, vector<32x240xf32> -> vector<32x256xf32>
    %cst_33 = arith.constant 0.000000e+00 : f32
    %107 = vector.broadcast %cst_33 : f32 to vector<32x15xf32>
    %108 = vector.extract_strided_slice %96 {offsets = [0, 0], sizes = [32, 241], strides = [1, 1]} : vector<32x256xf32> to vector<32x241xf32>
    %109 = tpu.concatenate %107, %108 in 1 : vector<32x15xf32>, vector<32x241xf32> -> vector<32x256xf32>
    %cst_34 = arith.constant 0.000000e+00 : f32
    %110 = vector.broadcast %cst_34 : f32 to vector<32x256xf32>
    %111 = vector.shape_cast %20 : vector<1x256xi1> to vector<1x256xi1>
    %112 = vector.broadcast %111 : vector<1x256xi1> to vector<32x256xi1>
    %113 = arith.select %112, %109, %110 : vector<32x256xi1>, vector<32x256xf32>
    %cst_35 = arith.constant 0.000000e+00 : f32
    %114 = vector.broadcast %cst_35 : f32 to vector<32x1xf32>
    %115 = vector.extract_strided_slice %96 {offsets = [0, 0], sizes = [32, 255], strides = [1, 1]} : vector<32x256xf32> to vector<32x255xf32>
    %116 = tpu.concatenate %114, %115 in 1 : vector<32x1xf32>, vector<32x255xf32> -> vector<32x256xf32>
    %cst_36 = arith.constant 0.000000e+00 : f32
    %117 = vector.broadcast %cst_36 : f32 to vector<32x256xf32>
    %118 = vector.shape_cast %18 : vector<1x256xi1> to vector<1x256xi1>
    %119 = vector.broadcast %118 : vector<1x256xi1> to vector<32x256xi1>
    %120 = arith.select %119, %116, %117 : vector<32x256xi1>, vector<32x256xf32>
    %cst_37 = arith.constant 0.000000e+00 : f32
    %121 = vector.broadcast %cst_37 : f32 to vector<32x1xf32>
    %122 = vector.extract_strided_slice %96 {offsets = [0, 1], sizes = [32, 255], strides = [1, 1]} : vector<32x256xf32> to vector<32x255xf32>
    %123 = tpu.concatenate %122, %121 in 1 : vector<32x255xf32>, vector<32x1xf32> -> vector<32x256xf32>
    %cst_38 = arith.constant 0.000000e+00 : f32
    %124 = vector.broadcast %cst_38 : f32 to vector<32x256xf32>
    %125 = vector.shape_cast %20 : vector<1x256xi1> to vector<1x256xi1>
    %126 = vector.broadcast %125 : vector<1x256xi1> to vector<32x256xi1>
    %127 = arith.select %126, %123, %124 : vector<32x256xi1>, vector<32x256xf32>
    %cst_39 = arith.constant 0.000000e+00 : f32
    %128 = vector.broadcast %cst_39 : f32 to vector<32x15xf32>
    %129 = vector.extract_strided_slice %96 {offsets = [0, 15], sizes = [32, 241], strides = [1, 1]} : vector<32x256xf32> to vector<32x241xf32>
    %130 = tpu.concatenate %129, %128 in 1 : vector<32x241xf32>, vector<32x15xf32> -> vector<32x256xf32>
    %cst_40 = arith.constant 0.000000e+00 : f32
    %131 = vector.broadcast %cst_40 : f32 to vector<32x256xf32>
    %132 = vector.shape_cast %18 : vector<1x256xi1> to vector<1x256xi1>
    %133 = vector.broadcast %132 : vector<1x256xi1> to vector<32x256xi1>
    %134 = arith.select %133, %130, %131 : vector<32x256xi1>, vector<32x256xf32>
    %cst_41 = arith.constant 0.000000e+00 : f32
    %135 = vector.broadcast %cst_41 : f32 to vector<32x16xf32>
    %136 = vector.extract_strided_slice %96 {offsets = [0, 16], sizes = [32, 240], strides = [1, 1]} : vector<32x256xf32> to vector<32x240xf32>
    %137 = tpu.concatenate %136, %135 in 1 : vector<32x240xf32>, vector<32x16xf32> -> vector<32x256xf32>
    %cst_42 = arith.constant 0.000000e+00 : f32
    %138 = vector.broadcast %cst_42 : f32 to vector<32x17xf32>
    %139 = vector.extract_strided_slice %96 {offsets = [0, 17], sizes = [32, 239], strides = [1, 1]} : vector<32x256xf32> to vector<32x239xf32>
    %140 = tpu.concatenate %139, %138 in 1 : vector<32x239xf32>, vector<32x17xf32> -> vector<32x256xf32>
    %cst_43 = arith.constant 0.000000e+00 : f32
    %141 = vector.broadcast %cst_43 : f32 to vector<32x256xf32>
    %142 = vector.shape_cast %20 : vector<1x256xi1> to vector<1x256xi1>
    %143 = vector.broadcast %142 : vector<1x256xi1> to vector<32x256xi1>
    %144 = arith.select %143, %140, %141 : vector<32x256xi1>, vector<32x256xf32>
    %145 = tpu.concatenate %103, %106, %113, %120, %96, %127, %134, %137, %144 in 0 : vector<32x256xf32>, vector<32x256xf32>, vector<32x256xf32>, vector<32x256xf32>, vector<32x256xf32>, vector<32x256xf32>, vector<32x256xf32>, vector<32x256xf32>, vector<32x256xf32> -> vector<288x256xf32>
    %c0_44 = arith.constant 0 : index
    %c0_45 = arith.constant 0 : index
    %146 = vector.load %arg4[%c0_44, %c0_45] : memref<32x288xbf16, #tpu.memory_space<vmem>>, vector<32x288xbf16>
    %147 = arith.truncf %145 : vector<288x256xf32> to vector<288x256xbf16>
    %cst_46 = arith.constant dense<0.000000e+00> : vector<32x256xf32>
    %148 = tpu.matmul %146, %147, %cst_46 {dimension_numbers = #tpu.dot_dimension_numbers<[1], [0], [0], [1], [0, 0, 1, 1], [], []>} : vector<32x288xbf16>, vector<288x256xbf16>, vector<32x256xf32> -> vector<32x256xf32>
    %cst_47 = arith.constant dense<0.000000e+00> : vector<32xf32>
    %149 = vector.multi_reduction <add>, %148, %cst_47 [1] : vector<32x256xf32> to vector<32xf32>
    %150 = vector.shape_cast %149 : vector<32xf32> to vector<32x1xf32>
    %cst_48 = arith.constant 2.560000e+02 : f32
    %151 = vector.broadcast %cst_48 : f32 to vector<32x1xf32>
    %152 = arith.divf %150, %151 : vector<32x1xf32>
    %153 = vector.broadcast %152 : vector<32x1xf32> to vector<32x256xf32>
    %154 = arith.subf %148, %153 : vector<32x256xf32>
    %155 = arith.mulf %154, %154 : vector<32x256xf32>
    %cst_49 = arith.constant dense<0.000000e+00> : vector<32xf32>
    %156 = vector.multi_reduction <add>, %155, %cst_49 [1] : vector<32x256xf32> to vector<32xf32>
    %157 = vector.shape_cast %156 : vector<32xf32> to vector<32x1xf32>
    %cst_50 = arith.constant 2.560000e+02 : f32
    %158 = vector.broadcast %cst_50 : f32 to vector<32x1xf32>
    %159 = arith.divf %157, %158 : vector<32x1xf32>
    %cst_51 = arith.constant 9.99999974E-6 : f32
    %160 = vector.broadcast %cst_51 : f32 to vector<32x1xf32>
    %161 = arith.addf %159, %160 : vector<32x1xf32>
    %162 = math.rsqrt %161 : vector<32x1xf32>
    %163 = vector.broadcast %162 : vector<32x1xf32> to vector<32x256xf32>
    %164 = arith.mulf %154, %163 : vector<32x256xf32>
    %cst_52 = arith.constant 0.000000e+00 : f32
    %165 = vector.broadcast %cst_52 : f32 to vector<32x256xf32>
    %166 = arith.cmpf ogt, %164, %165 : vector<32x256xf32>
    %c0_53 = arith.constant 0 : index
    %c0_54 = arith.constant 0 : index
    %167 = vector.load %arg5[%c0_53, %c0_54] : memref<1x1xf32, #tpu.memory_space<vmem>>, vector<1x1xf32>
    %168 = vector.broadcast %167 : vector<1x1xf32> to vector<32x256xf32>
    %169 = arith.mulf %168, %164 : vector<32x256xf32>
    %170 = arith.select %166, %164, %169 : vector<32x256xi1>, vector<32x256xf32>
    %c0_55 = arith.constant 0 : index
    %c0_56 = arith.constant 0 : index
    %171 = vector.load %arg6[%c0_55, %c0_56] : memref<32x256xf32, #tpu.memory_space<vmem>>, vector<32x256xf32>
    tpu.vector_store %arg6[%c0_55, %c0_56], %170 {strides = array<i32>} : memref<32x256xf32, #tpu.memory_space<vmem>>, vector<32x256xf32>,
    return
  }
  func.func @transform_0(%arg0: i32) -> (i32, i32, i32) {
    %c0_i32 = arith.constant 0 : i32
    %c0_i32_0 = arith.constant 0 : i32
    %c0_i32_1 = arith.constant 0 : i32
    return %arg0, %c0_i32, %c0_i32_0 : i32, i32, i32
  }
  func.func @transform_1(%arg0: i32) -> (i32, i32) {
    %c0_i32 = arith.constant 0 : i32
    %c0_i32_0 = arith.constant 0 : i32
    %c0_i32_1 = arith.constant 0 : i32
    return %c0_i32, %c0_i32_0 : i32, i32
  }
  func.func @transform_2(%arg0: i32) -> (i32, i32) {
    %c0_i32 = arith.constant 0 : i32
    %c0_i32_0 = arith.constant 0 : i32
    %c0_i32_1 = arith.constant 0 : i32
    return %c0_i32, %c0_i32_0 : i32, i32
  }
  func.func @transform_3(%arg0: i32) -> (i32, i32) {
    %c0_i32 = arith.constant 0 : i32
    %c0_i32_0 = arith.constant 0 : i32
    %c0_i32_1 = arith.constant 0 : i32
    return %c0_i32, %c0_i32_0 : i32, i32
  }
  func.func @transform_4(%arg0: i32) -> (i32, i32) {
    %c0_i32 = arith.constant 0 : i32
    %c0_i32_0 = arith.constant 0 : i32
    %c0_i32_1 = arith.constant 0 : i32
    return %c0_i32, %c0_i32_0 : i32, i32
  }
  func.func @transform_5(%arg0: i32) -> (i32, i32) {
    %c0_i32 = arith.constant 0 : i32
    %c0_i32_0 = arith.constant 0 : i32
    return %arg0, %c0_i32 : i32, i32
  }
}

</mosaic_0001>

<llo_original>
// kernel: tpu_custom_call.1
$region0: #{tpu_custom_call.1}
  #allocation0 [shape = 'u32[]', space=smem, size = 0x4, offset = 0x4, fixed_abs, tag = 'smem constant byte address 0x4 - core index']
  #allocation1 [shape = 'u32[144,128]{1,0:T(1,128)}', space=vmem, size = 0x12000, scoped, tag = 'internal scratch']
  #allocation2 [shape = 'f32[1,1]{1,0:T(1,128)S(1)}', space=vmem, size = 0x200, scoped, tag = 'scoped memory for tpu_custom_call.1']
  #allocation3 [shape = 'f32[1,1]{1,0:T(1,128)S(1)}', space=vmem, size = 0x200, scoped, tag = 'scoped memory for tpu_custom_call.1']
  %s0 = inlined_call_operand.hbm [shape: f32[2,4,256], index: 0, kind: input, shape index: {}]
  %s1 = inlined_call_operand.hbm [shape: bf16[32,36], index: 1, kind: input, shape index: {}]
  %s2 = inlined_call_operand.<no memory space> [shape: f32[1,1], index: 2, kind: input, shape index: {}]
  %s3 = inlined_call_operand.hbm [shape: bf16[32,288], index: 3, kind: input, shape index: {}]
  %s4 = inlined_call_operand.<no memory space> [shape: f32[1,1], index: 4, kind: input, shape index: {}]
  %s5 = inlined_call_operand.hbm [shape: f32[64,256], index: 5, kind: output, shape index: {}]
  %s6 = sld [smem:[#allocation0]]
  $region65: #{tpu_custom_call.1} parent=0
    _
  %s8 = ssub.s32 1, %s6
  %s9 = scalar_select 0, %s8, %s6
  %v10 = vstv %s2
  %11 = vst [vmem:[#allocation2] sm:$0x1] %v10
  %v12 = vstv %s4
  %13 = vst [vmem:[#allocation3] sm:$0x1] %v12
  $region1: #{tpu_custom_call.1} parent=0
    #allocation4 [shape = 'u8[8192]{0}', space=vmem, size = 0x2000, scoped, tag = 'input window, operand 0']
    #allocation5 [shape = 's32[2]{0}', space=sflag, size = 0x8, scoped, tag = 'scoped memory for tpu_custom_call.1']
    #allocation6 [shape = 's32[2]{0}', space=sflag, size = 0x8, scoped, tag = 'scoped memory for tpu_custom_call.1']
    #allocation7 [shape = 'u8[8192]{0}', space=vmem, size = 0x2000, scoped, tag = 'input window, operand 1, single buffered']
    #allocation8 [shape = 's32[1]{0}', space=sflag, size = 0x4, scoped, tag = 'scoped memory for tpu_custom_call.1']
    #allocation9 [shape = 'u8[24576]{0}', space=vmem, size = 0x6000, scoped, tag = 'input window, operand 3, single buffered']
    #allocation10 [shape = 'u8[65536]{0}', space=vmem, size = 0x10000, scoped, tag = 'output window, operand 0']
    %14 = vsyncpa [#allocation5], 0
    %s15 = scalar_lea.sflag [#allocation5], 1
    %16 = vsyncpa %s15, 0
    %17 = vsyncpa [#allocation8], 0
    %18 = vsyncpa [#allocation6], 0
    %s19 = scalar_lea.sflag [#allocation6], 1
    %20 = vsyncpa %s19, 0
    loop: start=0, step=1, limit=4
    $region2: #{tpu_custom_call.1} parent=1 // loop_pre_header
      _
    $region3: #{tpu_custom_call.1} parent=1 // loop_header
      %s22 = sphi 0, %s26
      %p23 = scmp.ge.s32.totalorder %s22, 4
      %s32 = sphi 0, %s34
      %s35 = sphi 0, %s32
      %s36 = sphi 0, %s35
      %s52 = sphi 0, %s36
      %s56 = sphi 0, %s56
      %s58 = sphi 0, %s56
      %s59 = sphi 0, %s58
      %s73 = sphi 0, %s59
      %s77 = sphi 0, %s77
      %s79 = sphi 0, %s77
      %s80 = sphi 0, %s79
      %s94 = sphi 0, %s80
      %s98 = sphi 0, %s98
      %s100 = sphi 0, %s98
      %s101 = sphi 0, %s100
      %s115 = sphi 0, %s101
      %s119 = sphi 0, %s119
      %s121 = sphi 0, %s119
      %s122 = sphi 0, %s121
      %s136 = sphi 0, %s122
      %s142 = sphi 0, %s144
      %s145 = sphi 0, %s142
      %s146 = sphi 0, %s145
      %s162 = sphi 0, %s146
    $region4: #{tpu_custom_call.1} parent=1 // loop_header_branch
      %25 = sbr.rel (%p23) target = $region8
    $region5: #{tpu_custom_call.1} parent=1 // loop_body
      %s27 = ssub.s32 %s22, 1
      %s28 = ssub.s32 %s22, 2
      %s29 = sadd.s32 %s22, 1
      %s30 = ssub.s32 %s22, %s29
      %p31 = scmp.eq.s32.totalorder %s30, 0
      %s33 = sadd.s32 %s32, 1
      %s34 = scalar_select %p31, %s32, %s33
      %p37 = pneg %p31
      %p38 = scmp.eq.s32.totalorder %s22, 1
      %p39 = por %p37, %p38
      %p40 = scmp.ne.s32.totalorder %s32, %s35
      %p41 = scmp.eq.s32.totalorder %s22, 0
      %p42 = por %p40, %p41
      %p43 = scmp.ne.s32.totalorder %s32, %s35
      %p44 = scmp.eq.s32.totalorder %s27, 1
      %p45 = por %p43, %p44
      %p46 = scmp.ne.s32.totalorder %s35, %s36
      %p47 = scmp.eq.s32.totalorder %s27, 0
      %p48 = por %p46, %p47
      %p49 = scmp.ne.s32.totalorder %s35, %s36
      %p50 = scmp.eq.s32.totalorder %s28, 1
      %p51 = por %p49, %p50
      %p53 = scmp.ne.s32.totalorder %s36, %s52
      %p54 = scmp.eq.s32.totalorder %s28, 0
      %p55 = por %p53, %p54
      %s57 = sadd.s32 %s56, 1
      %p60 = scmp.eq.s32.totalorder %s22, 1
      %p61 = scmp.ne.s32.totalorder %s56, %s58
      %p62 = scmp.eq.s32.totalorder %s22, 0
      %p63 = por %p61, %p62
      %p64 = scmp.ne.s32.totalorder %s56, %s58
      %p65 = scmp.eq.s32.totalorder %s27, 1
      %p66 = por %p64, %p65
      %p67 = scmp.ne.s32.totalorder %s58, %s59
      %p68 = scmp.eq.s32.totalorder %s27, 0
      %p69 = por %p67, %p68
      %p70 = scmp.ne.s32.totalorder %s58, %s59
      %p71 = scmp.eq.s32.totalorder %s28, 1
      %p72 = por %p70, %p71
      %p74 = scmp.ne.s32.totalorder %s59, %s73
      %p75 = scmp.eq.s32.totalorder %s28, 0
      %p76 = por %p74, %p75
      %s78 = sadd.s32 %s77, 1
      %p81 = scmp.eq.s32.totalorder %s22, 1
      %p82 = scmp.ne.s32.totalorder %s77, %s79
      %p83 = scmp.eq.s32.totalorder %s22, 0
      %p84 = por %p82, %p83
      %p85 = scmp.ne.s32.totalorder %s77, %s79
      %p86 = scmp.eq.s32.totalorder %s27, 1
      %p87 = por %p85, %p86
      %p88 = scmp.ne.s32.totalorder %s79, %s80
      %p89 = scmp.eq.s32.totalorder %s27, 0
      %p90 = por %p88, %p89
      %p91 = scmp.ne.s32.totalorder %s79, %s80
      %p92 = scmp.eq.s32.totalorder %s28, 1
      %p93 = por %p91, %p92
      %p95 = scmp.ne.s32.totalorder %s80, %s94
      %p96 = scmp.eq.s32.totalorder %s28, 0
      %p97 = por %p95, %p96
      %s99 = sadd.s32 %s98, 1
      %p102 = scmp.eq.s32.totalorder %s22, 1
      %p103 = scmp.ne.s32.totalorder %s98, %s100
      %p104 = scmp.eq.s32.totalorder %s22, 0
      %p105 = por %p103, %p104
      %p106 = scmp.ne.s32.totalorder %s98, %s100
      %p107 = scmp.eq.s32.totalorder %s27, 1
      %p108 = por %p106, %p107
      %p109 = scmp.ne.s32.totalorder %s100, %s101
      %p110 = scmp.eq.s32.totalorder %s27, 0
      %p111 = por %p109, %p110
      %p112 = scmp.ne.s32.totalorder %s100, %s101
      %p113 = scmp.eq.s32.totalorder %s28, 1
      %p114 = por %p112, %p113
      %p116 = scmp.ne.s32.totalorder %s101, %s115
      %p117 = scmp.eq.s32.totalorder %s28, 0
      %p118 = por %p116, %p117
      %s120 = sadd.s32 %s119, 1
      %p123 = scmp.eq.s32.totalorder %s22, 1
      %p124 = scmp.ne.s32.totalorder %s119, %s121
      %p125 = scmp.eq.s32.totalorder %s22, 0
      %p126 = por %p124, %p125
      %p127 = scmp.ne.s32.totalorder %s119, %s121
      %p128 = scmp.eq.s32.totalorder %s27, 1
      %p129 = por %p127, %p128
      %p130 = scmp.ne.s32.totalorder %s121, %s122
      %p131 = scmp.eq.s32.totalorder %s27, 0
      %p132 = por %p130, %p131
      %p133 = scmp.ne.s32.totalorder %s121, %s122
      %p134 = scmp.eq.s32.totalorder %s28, 1
      %p135 = por %p133, %p134
      %p137 = scmp.ne.s32.totalorder %s122, %s136
      %p138 = scmp.eq.s32.totalorder %s28, 0
      %p139 = por %p137, %p138
      %s140 = ssub.s32 %s22, %s29
      %p141 = scmp.eq.s32.totalorder %s140, 0
      %s143 = sadd.s32 %s142, 1
      %s144 = scalar_select %p141, %s142, %s143
      %p147 = pneg %p141
      %p148 = scmp.eq.s32.totalorder %s22, 1
      %p149 = por %p147, %p148
      %p150 = scmp.ne.s32.totalorder %s142, %s145
      %p151 = scmp.eq.s32.totalorder %s22, 0
      %p152 = por %p150, %p151
      %p153 = scmp.ne.s32.totalorder %s142, %s145
      %p154 = scmp.eq.s32.totalorder %s27, 1
      %p155 = por %p153, %p154
      %p156 = scmp.ne.s32.totalorder %s145, %s146
      %p157 = scmp.eq.s32.totalorder %s27, 0
      %p158 = por %p156, %p157
      %p159 = scmp.ne.s32.totalorder %s145, %s146
      %p160 = scmp.eq.s32.totalorder %s28, 1
      %p161 = por %p159, %p160
      %p163 = scmp.ne.s32.totalorder %s146, %s162
      %p164 = scmp.eq.s32.totalorder %s28, 0
      %p165 = por %p163, %p164
      %p166 = scmp.le.s32.totalorder 1, %s22
      %p167 = scmp.lt.s32.totalorder %s22, 3
      %p168 = pnand %p166, %p167
      %p169 = pneg %p168
      // Predicated region
      $region9: #{tpu_custom_call.1} parent=5 // pred_check
        _
      $region10: #{tpu_custom_call.1} parent=5 // pred_check_branch
        %171 = sbr.rel (%p168) target = $region12
      $region11: #{tpu_custom_call.1} parent=5 // pred_region
        %s172 = ssub.s32 %s22, 1
        // Predicated region
        $region13: #{tpu_custom_call.1} parent=11 // pred_check
          %p173 = pneg %p69
        $region14: #{tpu_custom_call.1} parent=11 // pred_check_branch
          %175 = sbr.rel (%p173) target = $region16
        $region15: #{tpu_custom_call.1} parent=11 // pred_region
          %s177 = ssub.s32 256, 256
          %178 = vsyncadd [#allocation8], %s177
          %s179 = sshll.u32 [#allocation7], 4
          %s180 = int_to_ptr.vmem [resolvable:$true] %s179
          %185 = dma.hbm_to_vmem [thread:$0]  %s1, 256, %s180, [#allocation8], 64, 64, 4
        $region16: #{tpu_custom_call.1} parent=11 // pred_fallthru
          _
        // Predicated region
        $region17: #{tpu_custom_call.1} parent=11 // pred_check
          %p186 = pneg %p90
        $region18: #{tpu_custom_call.1} parent=11 // pred_check_branch
          %188 = sbr.rel (%p186) target = $region20
        $region19: #{tpu_custom_call.1} parent=11 // pred_region
          _
        $region20: #{tpu_custom_call.1} parent=11 // pred_fallthru
          _
        // Predicated region
        $region21: #{tpu_custom_call.1} parent=11 // pred_check
          %p189 = pneg %p111
        $region22: #{tpu_custom_call.1} parent=11 // pred_check_branch
          %191 = sbr.rel (%p189) target = $region24
        $region23: #{tpu_custom_call.1} parent=11 // pred_region
          %s193 = ssub.s32 768, 768
          %194 = vsyncadd [#allocation8], %s193
          %s195 = sshll.u32 [#allocation9], 4
          %s196 = int_to_ptr.vmem [resolvable:$true] %s195
          %201 = dma.hbm_to_vmem [thread:$0]  %s3, 768, %s196, [#allocation8], 192, 192, 12
        $region24: #{tpu_custom_call.1} parent=11 // pred_fallthru
          _
        // Predicated region
        $region25: #{tpu_custom_call.1} parent=11 // pred_check
          %p202 = pneg %p132
        $region26: #{tpu_custom_call.1} parent=11 // pred_check_branch
          %204 = sbr.rel (%p202) target = $region28
        $region27: #{tpu_custom_call.1} parent=11 // pred_region
          _
        $region28: #{tpu_custom_call.1} parent=11 // pred_fallthru
          _
      $region12: #{tpu_custom_call.1} parent=5 // pred_fallthru
        _
      %p205 = scmp.lt.s32.totalorder %s22, 2
      // Predicated region
      $region29: #{tpu_custom_call.1} parent=5 // pred_check
        %p206 = pneg %p205
      $region30: #{tpu_custom_call.1} parent=5 // pred_check_branch
        %208 = sbr.rel (%p206) target = $region32
      $region31: #{tpu_custom_call.1} parent=5 // pred_region
        // Predicated region
        $region33: #{tpu_custom_call.1} parent=31 // pred_check
          %p209 = pneg %p42
        $region34: #{tpu_custom_call.1} parent=31 // pred_check_branch
          %211 = sbr.rel (%p209) target = $region36
        $region35: #{tpu_custom_call.1} parent=31 // pred_region
          %s212 = sand.u32 %s32, 1
          %s213 = scalar_lea.sflag [#allocation5], %s212
          %s214 = sand.u32 %s32, 1
          %s215 = smul.addr %s214, 8
          %s216 = scalar_lea.vmem [#allocation4], %s215
          %s218 = ssub.s32 128, 128
          %219 = vsyncadd %s213, %s218
          %s220 = smul.addr %s22, 2
          %s221 = smul.addr %s220, 64
          %s222 = scalar_lea.hbm %s0, %s221
          %s224 = sshll.u32 %s216, 4
          %s225 = int_to_ptr.vmem [resolvable:$true] %s224
          %227 = dma.hbm_to_vmem [thread:$0]  %s222, 128, %s225, %s213
        $region36: #{tpu_custom_call.1} parent=31 // pred_fallthru
          _
      $region32: #{tpu_custom_call.1} parent=5 // pred_fallthru
        _
      %p228 = scmp.le.s32.totalorder 1, %s22
      %p229 = scmp.lt.s32.totalorder %s22, 3
      %p230 = pnand %p228, %p229
      %p231 = pneg %p230
      // Predicated region
      $region37: #{tpu_custom_call.1} parent=5 // pred_check
        _
      $region38: #{tpu_custom_call.1} parent=5 // pred_check_branch
        %233 = sbr.rel (%p230) target = $region40
      $region39: #{tpu_custom_call.1} parent=5 // pred_region
        %s234 = ssub.s32 %s22, 1
        %s235 = sand.u32 %s35, 1
        %s236 = scalar_lea.sflag [#allocation5], %s235
        %s237 = sand.u32 %s35, 1
        %s238 = smul.addr %s237, 8
        %s239 = scalar_lea.vmem [#allocation4], %s238
        // Predicated region
        $region41: #{tpu_custom_call.1} parent=39 // pred_check
          %p240 = pneg %p48
        $region42: #{tpu_custom_call.1} parent=39 // pred_check_branch
          %242 = sbr.rel (%p240) target = $region44
        $region43: #{tpu_custom_call.1} parent=39 // pred_region
          %243 = dma.done %s236, 128
        $region44: #{tpu_custom_call.1} parent=39 // pred_fallthru
          _
        // Predicated region
        $region45: #{tpu_custom_call.1} parent=39 // pred_check
          %p244 = pneg %p69
        $region46: #{tpu_custom_call.1} parent=39 // pred_check_branch
          %246 = sbr.rel (%p244) target = $region48
        $region47: #{tpu_custom_call.1} parent=39 // pred_region
          %247 = dma.done [#allocation8], 256
        $region48: #{tpu_custom_call.1} parent=39 // pred_fallthru
          _
        // Predicated region
        $region49: #{tpu_custom_call.1} parent=39 // pred_check
          %p248 = pneg %p111
        $region50: #{tpu_custom_call.1} parent=39 // pred_check_branch
          %250 = sbr.rel (%p248) target = $region52
        $region51: #{tpu_custom_call.1} parent=39 // pred_region
          %251 = dma.done [#allocation8], 768
        $region52: #{tpu_custom_call.1} parent=39 // pred_fallthru
          _
        %s252 = sand.u32 %s35, 1
        %s253 = scalar_lea.sflag [#allocation5], %s252
        %s254 = sand.u32 %s35, 1
        %s255 = smul.addr %s254, 8
        %s256 = scalar_lea.vmem [#allocation4], %s255
        %p257 = pneg %p48
        %p258 = pneg %p45
        %p259 = pneg %p69
        %p260 = pneg %p66
        %p261 = pneg %p90
        %p262 = pneg %p87
        %p263 = pneg %p111
        %p264 = pneg %p108
        %p265 = pneg %p132
        %p266 = pneg %p129
        %p267 = pneg %p158
        %p268 = pneg %p155
        %s269 = sand.u32 %s145, 1
        %s270 = scalar_lea.sflag [#allocation6], %s269
        %s271 = sand.u32 %s145, 1
        %s272 = smul.addr %s271, 64
        %s273 = scalar_lea.vmem [#allocation10], %s272
        %s274 = smul.u32 4, %s27
        %v276 = vlaneseq
        %v277 = vand.u32 %v276, 127
        %v278 = vadd.s32 %v277, 128
        %vm279 = vcmp.lt.s32.totalorder %v277, 0
        %v280 = vsub.s32 0, %v277
        %v281 = vsel %vm279, %v280, %v277
        %v282 = vshrl.u32 %v281, 4
        %v283 = vand.u32 %v281, 15
        %v284 = vsub.s32 0, %v283
        %v285 = vsel %vm279, %v284, %v283
        %vm286 = vcmp.lt.s32.totalorder %v278, 0
        %v287 = vsub.s32 0, %v278
        %v288 = vsel %vm286, %v287, %v278
        %v289 = vshrl.u32 %v288, 4
        %v290 = vand.u32 %v288, 15
        %v291 = vsub.s32 0, %v290
        %v292 = vsel %vm286, %v291, %v290
        %vm293 = vcmp.ne.s32.totalorder %v285, 0
        %vm294 = vcmp.ne.s32.totalorder %v292, 0
        %vm295 = vcmp.lt.s32.totalorder %v285, 0
        %vm296 = vcmp.lt.s32.totalorder %v292, 0
        %vm297 = vmand %vm295, %vm293
        %vm298 = vmand %vm296, %vm294
        %v299 = vadd.s32 %v285, 16
        %v300 = vadd.s32 %v292, 16
        %v301 = vsel %vm297, %v299, %v285
        %v302 = vsel %vm298, %v300, %v292
        %vm303 = vcmp.ge.s32.totalorder %v301, 1
        %vm304 = vcmp.ge.s32.totalorder %v302, 1
        %vm305 = vcmp.le.s32.totalorder %v301, 14
        %vm306 = vcmp.le.s32.totalorder %v302, 14
        %v307 = vld [vmem:[%s239] sm:$0xff]
        %v309 = vcombine.high %v307, %v307
        %310 = vrot.lane.b32.xlu0 %v307, 17
        %v311 = vpop.permute.xlu0 %310
        %312 = vrot.lane.b32.xlu0 %v309, 17
        %v313 = vpop.permute.xlu0 %312
        %vm314 = vcmask 138240
        %v315 = vsel %vm314, %v311, %v313
        %v318 = vsel %vm314, 0.0, %v311
        %v319 = vsel %vm303, 1, 0
        %v320 = vsel %vm304, 1, 0
        %vm321 = vcmp.eq.s32.totalorder %v319, 1
        %vm322 = vcmp.eq.s32.totalorder %v320, 1
        %v323 = vsel %vm321, %v318, 0.0
        %v324 = vsel %vm322, %v315, 0.0
        %325 = vrot.lane.b32.xlu0 %v307, 16
        %v326 = vpop.permute.xlu0 %325
        %327 = vrot.lane.b32.xlu0 %v309, 16
        %v328 = vpop.permute.xlu0 %327
        %vm329 = vcmask 130048
        %v330 = vsel %vm329, %v326, %v328
        %v332 = vsel %vm329, 0.0, %v326
        %333 = vrot.lane.b32.xlu0 %v307, 15
        %v334 = vpop.permute.xlu0 %333
        %335 = vrot.lane.b32.xlu0 %v309, 15
        %v336 = vpop.permute.xlu0 %335
        %vm337 = vcmask 121856
        %v338 = vsel %vm337, %v334, %v336
        %v341 = vsel %vm337, 0.0, %v334
        %v342 = vsel %vm305, 1, 0
        %v343 = vsel %vm306, 1, 0
        %vm344 = vcmp.eq.s32.totalorder %v342, 1
        %vm345 = vcmp.eq.s32.totalorder %v343, 1
        %v346 = vsel %vm344, %v341, 0.0
        %v347 = vsel %vm345, %v338, 0.0
        %348 = vrot.lane.b32.xlu0 %v307, 1
        %v349 = vpop.permute.xlu0 %348
        %350 = vrot.lane.b32.xlu0 %v309, 1
        %v351 = vpop.permute.xlu0 %350
        %vm352 = vcmask 7168
        %v353 = vsel %vm352, %v349, %v351
        %v356 = vsel %vm352, 0.0, %v349
        %v357 = vsel %vm321, %v356, 0.0
        %v358 = vsel %vm322, %v353, 0.0
        %359 = vrot.lane.b32.xlu0 %v307, 127
        %v360 = vpop.permute.xlu0 %359
        %361 = vrot.lane.b32.xlu0 %v309, 127
        %v362 = vpop.permute.xlu0 %361
        %vm363 = vcmask 1039360
        %v364 = vsel %vm363, %v360, %v362
        %v367 = vsel %vm363, %v362, 0.0
        %v368 = vsel %vm344, %v364, 0.0
        %v369 = vsel %vm345, %v367, 0.0
        %370 = vrot.lane.b32.xlu0 %v307, 113
        %v371 = vpop.permute.xlu0 %370
        %372 = vrot.lane.b32.xlu0 %v309, 113
        %v373 = vpop.permute.xlu0 %372
        %vm374 = vcmask 924672
        %v375 = vsel %vm374, %v371, %v373
        %v378 = vsel %vm374, %v373, 0.0
        %v379 = vsel %vm321, %v375, 0.0
        %v380 = vsel %vm322, %v378, 0.0
        %381 = vrot.lane.b32.xlu0 %v307, 112
        %v382 = vpop.permute.xlu0 %381
        %383 = vrot.lane.b32.xlu0 %v309, 112
        %v384 = vpop.permute.xlu0 %383
        %vm385 = vcmask 916480
        %v386 = vsel %vm385, %v382, %v384
        %v388 = vsel %vm385, %v384, 0.0
        %389 = vrot.lane.b32.xlu0 %v307, 111
        %v390 = vpop.permute.xlu0 %389
        %391 = vrot.lane.b32.xlu0 %v309, 111
        %v392 = vpop.permute.xlu0 %391
        %vm393 = vcmask 908288
        %v394 = vsel %vm393, %v390, %v392
        %v397 = vsel %vm393, %v392, 0.0
        %v398 = vsel %vm344, %v394, 0.0
        %v399 = vsel %vm345, %v397, 0.0
        %v401 = vrot.slane %v332, 4
        %v402 = vrot.slane %v330, 4
        %v407 = vrot.slane %v357, 4
        %v408 = vrot.slane %v358, 4
        %v414 = vrot.slane %v368, 4
        %v415 = vrot.slane %v369, 4
        %v419 = vrot.slane %v386, 4
        %v420 = vrot.slane %v388, 4
        %vm423 = vcmask 1043456
        %v424 = vsel %vm423, %v323, %v401
        %v425 = vsel %vm423, %v324, %v402
        %v426 = vsel %vm423, %v346, %v407
        %v427 = vsel %vm423, %v347, %v408
        %v428 = vsel %vm423, %v307, %v414
        %v429 = vsel %vm423, %v309, %v415
        %v430 = vsel %vm423, %v379, %v419
        %v431 = vsel %vm423, %v380, %v420
        %v432 = vld [vmem:[#allocation7] sm:$0xf]
        %v433 = vld [vmem:[#allocation7 + $0x4] sm:$0xf]
        %v434 = vld [vmem:[#allocation7 + $0x8] sm:$0xf]
        %v435 = vld [vmem:[#allocation7 + $0xc] sm:$0xf]
        %v436 = vpack.c.bf16 %v426, %v424
        %v437 = vpack.c.bf16 %v427, %v425
        %v438 = vpack.c.bf16 %v430, %v428
        %v439 = vpack.c.bf16 %v431, %v429
        %v440 = vpack.c.bf16 %v398, %v398
        %v441 = vpack.c.bf16 %v399, %v399
        %v446 = vunpack.c.l.b16 %v432
        %v447 = vunpack.c.l.b16 %v433
        %v448 = vunpack.c.l.b16 %v434
        %v449 = vunpack.c.l.b16 %v435
        %v450 = vpack.c.b16 %v447, %v446
        %v451 = vpack.c.b16 %v449, %v448
        %vm452 = vcmask 293888
        %v454 = vsel %vm452, %v450, 0
        %v457 = vsel %vm452, %v451, 0
        %vm459 = vcmask 1041408
        %v461 = vsel %vm459, %v440, 0
        %v464 = vsel %vm459, %v441, 0
        %466 = vmatprep.subr.bf16.mxu0 0
        %467 = vmatpush1.bf16.msra.mxu0 0
        %468 = vmatprep.subr.bf16.mxu0 0
        %469 = vmatpush1.bf16.msra.mxu0 0
        %470 = vmatprep.subr.bf16.mxu0 0
        %471 = vmatpush1.bf16.msra.mxu0 0
        %472 = vmatprep.subr.bf16.mxu0 0
        %473 = vmatpush1.bf16.msra.mxu0 0
        %474 = vmatprep.subr.bf16.mxu0 0
        %475 = vmatpush1.bf16.msra.mxu0 0
        %476 = vmatprep.subr.bf16.mxu0 %v464
        %477 = vmatpush1.bf16.msra.mxu0 %v461
        %478 = vmatprep.subr.bf16.mxu0 %v439
        %479 = vmatpush1.bf16.msra.mxu0 %v438
        %480 = vmatprep.subr.bf16.mxu0 %v437
        %481 = vmatpush1.bf16.msra.mxu0 %v436
        %482 = vmatprep.subr.bf16.mxu0 0
        %483 = vmatpush2.bf16.msra.mxu0 0
        %484 = vmatprep.subr.bf16.mxu0 0
        %485 = vmatpush2.bf16.msra.mxu0 0
        %486 = vmatprep.subr.bf16.mxu0 0
        %487 = vmatpush2.bf16.msra.mxu0 0
        %488 = vmatprep.subr.bf16.mxu0 0
        %489 = vmatpush2.bf16.msra.mxu0 0
        %490 = vmatprep.subr.bf16.mxu0 0
        %491 = vmatpush2.bf16.msra.mxu0 0
        %492 = vmatprep.subr.bf16.mxu0 0
        %493 = vmatpush2.bf16.msra.mxu0 0
        %494 = vmatprep.subr.bf16.mxu0 0
        %495 = vmatpush2.bf16.msra.mxu0 0
        %496 = vmatprep.subr.bf16.mxu0 0
        %497 = vmatpush2.bf16.msra.mxu0 0
        %498 = vmatprep.mubr.bf16.mxu0 0
        %499 = vmatmul.mubr.bf16.gmra.mxu0 %v454
        %v500 = vpop.f32.mrf.mxu0
        %v501 = vadd.f32 0.0, %v500
        %v502 = vpop.f32.mrf.mxu0
        %v503 = vadd.f32 0.0, %v502
        %v504 = vpop.f32.mrf.mxu0
        %v505 = vadd.f32 0.0, %v504
        %v506 = vpop.f32.mrf.mxu0
        %v507 = vadd.f32 0.0, %v506
        %508 = vmatprep.mubr.bf16.mxu0 0
        %509 = vmatmul.mubr.bf16.gmra.mxu0 %v457
        %v510 = vpop.f32.mrf.mxu0
        %v511 = vadd.f32 0.0, %v510
        %v512 = vpop.f32.mrf.mxu0
        %v513 = vadd.f32 0.0, %v512
        %v514 = vpop.f32.mrf.mxu0
        %v515 = vadd.f32 0.0, %v514
        %v516 = vpop.f32.mrf.mxu0
        %v517 = vadd.f32 0.0, %v516
        %518 = vdwg.mxu0
        %v519 = vadd.f32 %v501, %v503
        %520 = vadd.xlane.f32.xlu0 %v519
        %v521 = vpop.xlane.xlu0 %520
        %v522 = vadd.f32 %v505, %v507
        %523 = vadd.xlane.f32.xlu0 %v522
        %v524 = vpop.xlane.xlu0 %523
        %v525 = vadd.f32 %v511, %v513
        %526 = vadd.xlane.f32.xlu0 %v525
        %v527 = vpop.xlane.xlu0 %526
        %v528 = vadd.f32 %v515, %v517
        %529 = vadd.xlane.f32.xlu0 %v528
        %v530 = vpop.xlane.xlu0 %529
        %v531 = vrcp.pop 256.0
        %v532 = vmul.f32 %v521, %v531
        %v533 = vmul.f32 %v524, %v531
        %v534 = vmul.f32 %v527, %v531
        %v535 = vmul.f32 %v530, %v531
        %v536 = vsub.f32 %v501, %v532
        %v537 = vsub.f32 %v503, %v532
        %v538 = vsub.f32 %v505, %v533
        %v539 = vsub.f32 %v507, %v533
        %v540 = vsub.f32 %v511, %v534
        %v541 = vsub.f32 %v513, %v534
        %v542 = vsub.f32 %v515, %v535
        %v543 = vsub.f32 %v517, %v535
        %v544 = vmul.f32 %v536, %v536
        %v545 = vmul.f32 %v537, %v537
        %v546 = vmul.f32 %v538, %v538
        %v547 = vmul.f32 %v539, %v539
        %v548 = vmul.f32 %v540, %v540
        %v549 = vmul.f32 %v541, %v541
        %v550 = vmul.f32 %v542, %v542
        %v551 = vmul.f32 %v543, %v543
        %v552 = vadd.f32 %v544, %v545
        %553 = vadd.xlane.f32.xlu0 %v552
        %v554 = vpop.xlane.xlu0 %553
        %v555 = vadd.f32 %v546, %v547
        %556 = vadd.xlane.f32.xlu0 %v555
        %v557 = vpop.xlane.xlu0 %556
        %v558 = vadd.f32 %v548, %v549
        %559 = vadd.xlane.f32.xlu0 %v558
        %v560 = vpop.xlane.xlu0 %559
        %v561 = vadd.f32 %v550, %v551
        %562 = vadd.xlane.f32.xlu0 %v561
        %v563 = vpop.xlane.xlu0 %562
        %v564 = vmul.f32 %v554, %v531
        %v565 = vmul.f32 %v557, %v531
        %v566 = vmul.f32 %v560, %v531
        %v567 = vmul.f32 %v563, %v531
        %v568 = vadd.f32 %v564, 1e-05
        %v569 = vadd.f32 %v565, 1e-05
        %v570 = vadd.f32 %v566, 1e-05
        %v571 = vadd.f32 %v567, 1e-05
        %v572 = vrsqrt.pop %v568
        %v573 = vrsqrt.pop %v569
        %v574 = vrsqrt.pop %v570
        %v575 = vrsqrt.pop %v571
        %v576 = vmul.f32 %v536, %v572
        %v577 = vmul.f32 %v537, %v572
        %v578 = vmul.f32 %v538, %v573
        %v579 = vmul.f32 %v539, %v573
        %v580 = vmul.f32 %v540, %v574
        %v581 = vmul.f32 %v541, %v574
        %v582 = vmul.f32 %v542, %v575
        %v583 = vmul.f32 %v543, %v575
        %vm584 = vcmp.gt.f32.partialorder %v576, 0.0
        %vm585 = vcmp.gt.f32.partialorder %v577, 0.0
        %vm586 = vcmp.gt.f32.partialorder %v578, 0.0
        %vm587 = vcmp.gt.f32.partialorder %v579, 0.0
        %vm588 = vcmp.gt.f32.partialorder %v580, 0.0
        %vm589 = vcmp.gt.f32.partialorder %v581, 0.0
        %vm590 = vcmp.gt.f32.partialorder %v582, 0.0
        %vm591 = vcmp.gt.f32.partialorder %v583, 0.0
        %v592 = vld [vmem:[#allocation2] sm:$0x1]
        %v594 = vlaneseq
        %v595 = vshrl.u32 %v594, 7
        %v596 = vsub.s32 0, %v595
        %v597 = vrot.slane %v592, %v596
        %598 = vset.pattern.permute.xlu0 0
        %599 = vperm.xlu0 %598, %v597
        %v600 = vpop.permute.xlu0 %599
        %v602 = vmul.f32 %v600, %v576
        %v603 = vmul.f32 %v600, %v577
        %v604 = vmul.f32 %v600, %v578
        %v605 = vmul.f32 %v600, %v579
        %v606 = vmul.f32 %v600, %v580
        %v607 = vmul.f32 %v600, %v581
        %v608 = vmul.f32 %v600, %v582
        %v609 = vmul.f32 %v600, %v583
        %v610 = vsel %vm584, %v576, %v602
        %v611 = vsel %vm585, %v577, %v603
        %v612 = vsel %vm586, %v578, %v604
        %v613 = vsel %vm587, %v579, %v605
        %v614 = vsel %vm588, %v580, %v606
        %v615 = vsel %vm589, %v581, %v607
        %v616 = vsel %vm590, %v582, %v608
        %v617 = vsel %vm591, %v583, %v609
        %626 = vrot.lane.b32.xlu0 %v610, 17
        %v627 = vpop.permute.xlu0 %626
        %628 = vrot.lane.b32.xlu0 %v611, 17
        %v629 = vpop.permute.xlu0 %628
        %630 = vrot.lane.b32.xlu0 %v612, 17
        %v631 = vpop.permute.xlu0 %630
        %632 = vrot.lane.b32.xlu0 %v613, 17
        %v633 = vpop.permute.xlu0 %632
        %634 = vrot.lane.b32.xlu0 %v614, 17
        %v635 = vpop.permute.xlu0 %634
        %636 = vrot.lane.b32.xlu0 %v615, 17
        %v637 = vpop.permute.xlu0 %636
        %638 = vrot.lane.b32.xlu0 %v616, 17
        %v639 = vpop.permute.xlu0 %638
        %640 = vrot.lane.b32.xlu0 %v617, 17
        %v641 = vpop.permute.xlu0 %640
        %v642 = vsel %vm314, %v627, %v629
        %v643 = vsel %vm314, %v631, %v633
        %v644 = vsel %vm314, %v635, %v637
        %v645 = vsel %vm314, %v639, %v641
        %v654 = vsel %vm314, 0.0, %v627
        %v655 = vsel %vm314, 0.0, %v631
        %v656 = vsel %vm314, 0.0, %v635
        %v657 = vsel %vm314, 0.0, %v639
        %v658 = vsel %vm321, %v654, 0.0
        %v659 = vsel %vm322, %v642, 0.0
        %v660 = vsel %vm321, %v655, 0.0
        %v661 = vsel %vm322, %v643, 0.0
        %v662 = vsel %vm321, %v656, 0.0
        %v663 = vsel %vm322, %v644, 0.0
        %v664 = vsel %vm321, %v657, 0.0
        %v665 = vsel %vm322, %v645, 0.0
        %666 = vrot.lane.b32.xlu0 %v610, 16
        %v667 = vpop.permute.xlu0 %666
        %668 = vrot.lane.b32.xlu0 %v611, 16
        %v669 = vpop.permute.xlu0 %668
        %670 = vrot.lane.b32.xlu0 %v612, 16
        %v671 = vpop.permute.xlu0 %670
        %672 = vrot.lane.b32.xlu0 %v613, 16
        %v673 = vpop.permute.xlu0 %672
        %674 = vrot.lane.b32.xlu0 %v614, 16
        %v675 = vpop.permute.xlu0 %674
        %676 = vrot.lane.b32.xlu0 %v615, 16
        %v677 = vpop.permute.xlu0 %676
        %678 = vrot.lane.b32.xlu0 %v616, 16
        %v679 = vpop.permute.xlu0 %678
        %680 = vrot.lane.b32.xlu0 %v617, 16
        %v681 = vpop.permute.xlu0 %680
        %v682 = vsel %vm329, %v667, %v669
        %v683 = vsel %vm329, %v671, %v673
        %v684 = vsel %vm329, %v675, %v677
        %v685 = vsel %vm329, %v679, %v681
        %v694 = vsel %vm329, 0.0, %v667
        %v695 = vsel %vm329, 0.0, %v671
        %v696 = vsel %vm329, 0.0, %v675
        %v697 = vsel %vm329, 0.0, %v679
        %698 = vrot.lane.b32.xlu0 %v610, 15
        %v699 = vpop.permute.xlu0 %698
        %700 = vrot.lane.b32.xlu0 %v611, 15
        %v701 = vpop.permute.xlu0 %700
        %702 = vrot.lane.b32.xlu0 %v612, 15
        %v703 = vpop.permute.xlu0 %702
        %704 = vrot.lane.b32.xlu0 %v613, 15
        %v705 = vpop.permute.xlu0 %704
        %706 = vrot.lane.b32.xlu0 %v614, 15
        %v707 = vpop.permute.xlu0 %706
        %708 = vrot.lane.b32.xlu0 %v615, 15
        %v709 = vpop.permute.xlu0 %708
        %710 = vrot.lane.b32.xlu0 %v616, 15
        %v711 = vpop.permute.xlu0 %710
        %712 = vrot.lane.b32.xlu0 %v617, 15
        %v713 = vpop.permute.xlu0 %712
        %v714 = vsel %vm337, %v699, %v701
        %v715 = vsel %vm337, %v703, %v705
        %v716 = vsel %vm337, %v707, %v709
        %v717 = vsel %vm337, %v711, %v713
        %v726 = vsel %vm337, 0.0, %v699
        %v727 = vsel %vm337, 0.0, %v703
        %v728 = vsel %vm337, 0.0, %v707
        %v729 = vsel %vm337, 0.0, %v711
        %v730 = vsel %vm344, %v726, 0.0
        %v731 = vsel %vm345, %v714, 0.0
        %v732 = vsel %vm344, %v727, 0.0
        %v733 = vsel %vm345, %v715, 0.0
        %v734 = vsel %vm344, %v728, 0.0
        %v735 = vsel %vm345, %v716, 0.0
        %v736 = vsel %vm344, %v729, 0.0
        %v737 = vsel %vm345, %v717, 0.0
        %738 = vrot.lane.b32.xlu0 %v610, 1
        %v739 = vpop.permute.xlu0 %738
        %740 = vrot.lane.b32.xlu0 %v611, 1
        %v741 = vpop.permute.xlu0 %740
        %742 = vrot.lane.b32.xlu0 %v612, 1
        %v743 = vpop.permute.xlu0 %742
        %744 = vrot.lane.b32.xlu0 %v613, 1
        %v745 = vpop.permute.xlu0 %744
        %746 = vrot.lane.b32.xlu0 %v614, 1
        %v747 = vpop.permute.xlu0 %746
        %748 = vrot.lane.b32.xlu0 %v615, 1
        %v749 = vpop.permute.xlu0 %748
        %750 = vrot.lane.b32.xlu0 %v616, 1
        %v751 = vpop.permute.xlu0 %750
        %752 = vrot.lane.b32.xlu0 %v617, 1
        %v753 = vpop.permute.xlu0 %752
        %v754 = vsel %vm352, %v739, %v741
        %v755 = vsel %vm352, %v743, %v745
        %v756 = vsel %vm352, %v747, %v749
        %v757 = vsel %vm352, %v751, %v753
        %v766 = vsel %vm352, 0.0, %v739
        %v767 = vsel %vm352, 0.0, %v743
        %v768 = vsel %vm352, 0.0, %v747
        %v769 = vsel %vm352, 0.0, %v751
        %v770 = vsel %vm321, %v766, 0.0
        %v771 = vsel %vm322, %v754, 0.0
        %v772 = vsel %vm321, %v767, 0.0
        %v773 = vsel %vm322, %v755, 0.0
        %v774 = vsel %vm321, %v768, 0.0
        %v775 = vsel %vm322, %v756, 0.0
        %v776 = vsel %vm321, %v769, 0.0
        %v777 = vsel %vm322, %v757, 0.0
        %778 = vrot.lane.b32.xlu0 %v610, 127
        %v779 = vpop.permute.xlu0 %778
        %780 = vrot.lane.b32.xlu0 %v611, 127
        %v781 = vpop.permute.xlu0 %780
        %782 = vrot.lane.b32.xlu0 %v612, 127
        %v783 = vpop.permute.xlu0 %782
        %784 = vrot.lane.b32.xlu0 %v613, 127
        %v785 = vpop.permute.xlu0 %784
        %786 = vrot.lane.b32.xlu0 %v614, 127
        %v787 = vpop.permute.xlu0 %786
        %788 = vrot.lane.b32.xlu0 %v615, 127
        %v789 = vpop.permute.xlu0 %788
        %790 = vrot.lane.b32.xlu0 %v616, 127
        %v791 = vpop.permute.xlu0 %790
        %792 = vrot.lane.b32.xlu0 %v617, 127
        %v793 = vpop.permute.xlu0 %792
        %v794 = vsel %vm363, %v779, %v781
        %v795 = vsel %vm363, %v783, %v785
        %v796 = vsel %vm363, %v787, %v789
        %v797 = vsel %vm363, %v791, %v793
        %v806 = vsel %vm363, %v781, 0.0
        %v807 = vsel %vm363, %v785, 0.0
        %v808 = vsel %vm363, %v789, 0.0
        %v809 = vsel %vm363, %v793, 0.0
        %v810 = vsel %vm344, %v794, 0.0
        %v811 = vsel %vm345, %v806, 0.0
        %v812 = vsel %vm344, %v795, 0.0
        %v813 = vsel %vm345, %v807, 0.0
        %v814 = vsel %vm344, %v796, 0.0
        %v815 = vsel %vm345, %v808, 0.0
        %v816 = vsel %vm344, %v797, 0.0
        %v817 = vsel %vm345, %v809, 0.0
        %818 = vrot.lane.b32.xlu0 %v610, 113
        %v819 = vpop.permute.xlu0 %818
        %820 = vrot.lane.b32.xlu0 %v611, 113
        %v821 = vpop.permute.xlu0 %820
        %822 = vrot.lane.b32.xlu0 %v612, 113
        %v823 = vpop.permute.xlu0 %822
        %824 = vrot.lane.b32.xlu0 %v613, 113
        %v825 = vpop.permute.xlu0 %824
        %826 = vrot.lane.b32.xlu0 %v614, 113
        %v827 = vpop.permute.xlu0 %826
        %828 = vrot.lane.b32.xlu0 %v615, 113
        %v829 = vpop.permute.xlu0 %828
        %830 = vrot.lane.b32.xlu0 %v616, 113
        %v831 = vpop.permute.xlu0 %830
        %832 = vrot.lane.b32.xlu0 %v617, 113
        %v833 = vpop.permute.xlu0 %832
        %v834 = vsel %vm374, %v819, %v821
        %v835 = vsel %vm374, %v823, %v825
        %v836 = vsel %vm374, %v827, %v829
        %v837 = vsel %vm374, %v831, %v833
        %v846 = vsel %vm374, %v821, 0.0
        %v847 = vsel %vm374, %v825, 0.0
        %v848 = vsel %vm374, %v829, 0.0
        %v849 = vsel %vm374, %v833, 0.0
        %v850 = vsel %vm321, %v834, 0.0
        %v851 = vsel %vm322, %v846, 0.0
        %v852 = vsel %vm321, %v835, 0.0
        %v853 = vsel %vm322, %v847, 0.0
        %v854 = vsel %vm321, %v836, 0.0
        %v855 = vsel %vm322, %v848, 0.0
        %v856 = vsel %vm321, %v837, 0.0
        %v857 = vsel %vm322, %v849, 0.0
        %858 = vrot.lane.b32.xlu0 %v610, 112
        %v859 = vpop.permute.xlu0 %858
        %860 = vrot.lane.b32.xlu0 %v611, 112
        %v861 = vpop.permute.xlu0 %860
        %862 = vrot.lane.b32.xlu0 %v612, 112
        %v863 = vpop.permute.xlu0 %862
        %864 = vrot.lane.b32.xlu0 %v613, 112
        %v865 = vpop.permute.xlu0 %864
        %866 = vrot.lane.b32.xlu0 %v614, 112
        %v867 = vpop.permute.xlu0 %866
        %868 = vrot.lane.b32.xlu0 %v615, 112
        %v869 = vpop.permute.xlu0 %868
        %870 = vrot.lane.b32.xlu0 %v616, 112
        %v871 = vpop.permute.xlu0 %870
        %872 = vrot.lane.b32.xlu0 %v617, 112
        %v873 = vpop.permute.xlu0 %872
        %v874 = vsel %vm385, %v859, %v861
        %v875 = vsel %vm385, %v863, %v865
        %v876 = vsel %vm385, %v867, %v869
        %v877 = vsel %vm385, %v871, %v873
        %v886 = vsel %vm385, %v861, 0.0
        %v887 = vsel %vm385, %v865, 0.0
        %v888 = vsel %vm385, %v869, 0.0
        %v889 = vsel %vm385, %v873, 0.0
        %890 = vrot.lane.b32.xlu0 %v610, 111
        %v891 = vpop.permute.xlu0 %890
        %892 = vrot.lane.b32.xlu0 %v611, 111
        %v893 = vpop.permute.xlu0 %892
        %894 = vrot.lane.b32.xlu0 %v612, 111
        %v895 = vpop.permute.xlu0 %894
        %896 = vrot.lane.b32.xlu0 %v613, 111
        %v897 = vpop.permute.xlu0 %896
        %898 = vrot.lane.b32.xlu0 %v614, 111
        %v899 = vpop.permute.xlu0 %898
        %900 = vrot.lane.b32.xlu0 %v615, 111
        %v901 = vpop.permute.xlu0 %900
        %902 = vrot.lane.b32.xlu0 %v616, 111
        %v903 = vpop.permute.xlu0 %902
        %904 = vrot.lane.b32.xlu0 %v617, 111
        %v905 = vpop.permute.xlu0 %904
        %v906 = vsel %vm393, %v891, %v893
        %v907 = vsel %vm393, %v895, %v897
        %v908 = vsel %vm393, %v899, %v901
        %v909 = vsel %vm393, %v903, %v905
        %v918 = vsel %vm393, %v893, 0.0
        %v919 = vsel %vm393, %v897, 0.0
        %v920 = vsel %vm393, %v901, 0.0
        %v921 = vsel %vm393, %v905, 0.0
        %v922 = vsel %vm344, %v906, 0.0
        %v923 = vsel %vm345, %v918, 0.0
        %v924 = vsel %vm344, %v907, 0.0
        %v925 = vsel %vm345, %v919, 0.0
        %v926 = vsel %vm344, %v908, 0.0
        %v927 = vsel %vm345, %v920, 0.0
        %v928 = vsel %vm344, %v909, 0.0
        %v929 = vsel %vm345, %v921, 0.0
        %v930 = vld [vmem:[#allocation9] sm:$0xff]
        %v931 = vld [vmem:[#allocation9 + $0x8] sm:$0xf]
        %v932 = vld [vmem:[#allocation9 + $0xc] sm:$0xff]
        %v933 = vld [vmem:[#allocation9 + $0x14] sm:$0xf]
        %v934 = vld [vmem:[#allocation9 + $0x18] sm:$0xff]
        %v935 = vld [vmem:[#allocation9 + $0x20] sm:$0xf]
        %v936 = vld [vmem:[#allocation9 + $0x24] sm:$0xff]
        %v937 = vld [vmem:[#allocation9 + $0x2c] sm:$0xf]
        %v938 = vpack.c.bf16 %v660, %v658
        %v939 = vpack.c.bf16 %v661, %v659
        %v940 = vpack.c.bf16 %v664, %v662
        %v941 = vpack.c.bf16 %v665, %v663
        %v942 = vpack.c.bf16 %v695, %v694
        %v943 = vpack.c.bf16 %v683, %v682
        %v944 = vpack.c.bf16 %v697, %v696
        %v945 = vpack.c.bf16 %v685, %v684
        %v946 = vpack.c.bf16 %v732, %v730
        %v947 = vpack.c.bf16 %v733, %v731
        %v948 = vpack.c.bf16 %v736, %v734
        %v949 = vpack.c.bf16 %v737, %v735
        %v950 = vpack.c.bf16 %v772, %v770
        %v951 = vpack.c.bf16 %v773, %v771
        %v952 = vpack.c.bf16 %v776, %v774
        %v953 = vpack.c.bf16 %v777, %v775
        %v954 = vpack.c.bf16 %v612, %v610
        %v955 = vpack.c.bf16 %v613, %v611
        %v956 = vpack.c.bf16 %v616, %v614
        %v957 = vpack.c.bf16 %v617, %v615
        %v958 = vpack.c.bf16 %v812, %v810
        %v959 = vpack.c.bf16 %v813, %v811
        %v960 = vpack.c.bf16 %v816, %v814
        %v961 = vpack.c.bf16 %v817, %v815
        %v962 = vpack.c.bf16 %v852, %v850
        %v963 = vpack.c.bf16 %v853, %v851
        %v964 = vpack.c.bf16 %v856, %v854
        %v965 = vpack.c.bf16 %v857, %v855
        %v966 = vpack.c.bf16 %v875, %v874
        %v967 = vpack.c.bf16 %v887, %v886
        %v968 = vpack.c.bf16 %v877, %v876
        %v969 = vpack.c.bf16 %v889, %v888
        %v970 = vpack.c.bf16 %v924, %v922
        %v971 = vpack.c.bf16 %v925, %v923
        %v972 = vpack.c.bf16 %v928, %v926
        %v973 = vpack.c.bf16 %v929, %v927
        %v982 = vunpack.c.l.b16 %v930
        %v983 = vunpack.c.h.b16 %v930
        %v984 = vunpack.c.l.b16 %v931
        %v985 = vunpack.c.l.b16 %v932
        %v986 = vunpack.c.h.b16 %v932
        %v987 = vunpack.c.l.b16 %v933
        %v988 = vunpack.c.l.b16 %v934
        %v989 = vunpack.c.h.b16 %v934
        %v990 = vunpack.c.l.b16 %v935
        %v991 = vunpack.c.l.b16 %v936
        %v992 = vunpack.c.h.b16 %v936
        %v993 = vunpack.c.l.b16 %v937
        %v994 = vpack.c.b16 %v985, %v982
        %v995 = vpack.c.b16 %v986, %v983
        %v996 = vpack.c.b16 %v987, %v984
        %v997 = vpack.c.b16 %v991, %v988
        %v998 = vpack.c.b16 %v992, %v989
        %v999 = vpack.c.b16 %v993, %v990
        %vm1004 = vcmask 261120
        %v1006 = vsel %vm1004, %v996, 0
        %v1009 = vsel %vm1004, %v999, 0
        %1011 = vmatprep.subr.bf16.mxu0 %v953
        %1012 = vmatpush1.bf16.msra.mxu0 %v952
        %1013 = vmatprep.subr.bf16.mxu0 %v951
        %1014 = vmatpush1.bf16.msra.mxu0 %v950
        %1015 = vmatprep.subr.bf16.mxu0 %v949
        %1016 = vmatpush1.bf16.msra.mxu0 %v948
        %1017 = vmatprep.subr.bf16.mxu0 %v947
        %1018 = vmatpush1.bf16.msra.mxu0 %v946
        %1019 = vmatprep.subr.bf16.mxu0 %v945
        %1020 = vmatpush1.bf16.msra.mxu0 %v944
        %1021 = vmatprep.subr.bf16.mxu0 %v943
        %1022 = vmatpush1.bf16.msra.mxu0 %v942
        %1023 = vmatprep.subr.bf16.mxu0 %v941
        %1024 = vmatpush1.bf16.msra.mxu0 %v940
        %1025 = vmatprep.subr.bf16.mxu0 %v939
        %1026 = vmatpush1.bf16.msra.mxu0 %v938
        %1027 = vmatprep.subr.bf16.mxu0 %v969
        %1028 = vmatpush2.bf16.msra.mxu0 %v968
        %1029 = vmatprep.subr.bf16.mxu0 %v967
        %1030 = vmatpush2.bf16.msra.mxu0 %v966
        %1031 = vmatprep.subr.bf16.mxu0 %v965
        %1032 = vmatpush2.bf16.msra.mxu0 %v964
        %1033 = vmatprep.subr.bf16.mxu0 %v963
        %1034 = vmatpush2.bf16.msra.mxu0 %v962
        %1035 = vmatprep.subr.bf16.mxu0 %v961
        %1036 = vmatpush2.bf16.msra.mxu0 %v960
        %1037 = vmatprep.subr.bf16.mxu0 %v959
        %1038 = vmatpush2.bf16.msra.mxu0 %v958
        %1039 = vmatprep.subr.bf16.mxu0 %v957
        %1040 = vmatpush2.bf16.msra.mxu0 %v956
        %1041 = vmatprep.subr.bf16.mxu0 %v955
        %1042 = vmatpush2.bf16.msra.mxu0 %v954
        %1043 = vmatprep.mubr.bf16.mxu0 %v995
        %1044 = vmatmul.mubr.bf16.gmra.mxu0 %v994
        %v1045 = vpop.f32.mrf.mxu0
        %v1046 = vadd.f32 0.0, %v1045
        %v1047 = vpop.f32.mrf.mxu0
        %v1048 = vadd.f32 0.0, %v1047
        %v1049 = vpop.f32.mrf.mxu0
        %v1050 = vadd.f32 0.0, %v1049
        %v1051 = vpop.f32.mrf.mxu0
        %v1052 = vadd.f32 0.0, %v1051
        %1053 = vmatprep.mubr.bf16.mxu0 %v998
        %1054 = vmatmul.mubr.bf16.gmra.mxu0 %v997
        %v1055 = vpop.f32.mrf.mxu0
        %v1056 = vadd.f32 0.0, %v1055
        %v1057 = vpop.f32.mrf.mxu0
        %v1058 = vadd.f32 0.0, %v1057
        %v1059 = vpop.f32.mrf.mxu0
        %v1060 = vadd.f32 0.0, %v1059
        %v1061 = vpop.f32.mrf.mxu0
        %v1062 = vadd.f32 0.0, %v1061
        %1063 = vdwg.mxu0
        %1064 = vmatprep.subr.bf16.mxu0 0
        %1065 = vmatpush1.bf16.msra.mxu0 0
        %1066 = vmatprep.subr.bf16.mxu0 0
        %1067 = vmatpush1.bf16.msra.mxu0 0
        %1068 = vmatprep.subr.bf16.mxu0 0
        %1069 = vmatpush1.bf16.msra.mxu0 0
        %1070 = vmatprep.subr.bf16.mxu0 0
        %1071 = vmatpush1.bf16.msra.mxu0 0
        %1072 = vmatprep.subr.bf16.mxu0 0
        %1073 = vmatpush1.bf16.msra.mxu0 0
        %1074 = vmatprep.subr.bf16.mxu0 0
        %1075 = vmatpush1.bf16.msra.mxu0 0
        %1076 = vmatprep.subr.bf16.mxu0 %v973
        %1077 = vmatpush1.bf16.msra.mxu0 %v972
        %1078 = vmatprep.subr.bf16.mxu0 %v971
        %1079 = vmatpush1.bf16.msra.mxu0 %v970
        %1080 = vmatprep.subr.bf16.mxu0 0
        %1081 = vmatpush2.bf16.msra.mxu0 0
        %1082 = vmatprep.subr.bf16.mxu0 0
        %1083 = vmatpush2.bf16.msra.mxu0 0
        %1084 = vmatprep.subr.bf16.mxu0 0
        %1085 = vmatpush2.bf16.msra.mxu0 0
        %1086 = vmatprep.subr.bf16.mxu0 0
        %1087 = vmatpush2.bf16.msra.mxu0 0
        %1088 = vmatprep.subr.bf16.mxu0 0
        %1089 = vmatpush2.bf16.msra.mxu0 0
        %1090 = vmatprep.subr.bf16.mxu0 0
        %1091 = vmatpush2.bf16.msra.mxu0 0
        %1092 = vmatprep.subr.bf16.mxu0 0
        %1093 = vmatpush2.bf16.msra.mxu0 0
        %1094 = vmatprep.subr.bf16.mxu0 0
        %1095 = vmatpush2.bf16.msra.mxu0 0
        %1096 = vmatprep.mubr.bf16.mxu0 0
        %1097 = vmatmul.mubr.bf16.gmra.mxu0 %v1006
        %v1098 = vpop.f32.mrf.mxu0
        %v1099 = vadd.f32 %v1046, %v1098
        %v1100 = vpop.f32.mrf.mxu0
        %v1101 = vadd.f32 %v1048, %v1100
        %v1102 = vpop.f32.mrf.mxu0
        %v1103 = vadd.f32 %v1050, %v1102
        %v1104 = vpop.f32.mrf.mxu0
        %v1105 = vadd.f32 %v1052, %v1104
        %1106 = vmatprep.mubr.bf16.mxu0 0
        %1107 = vmatmul.mubr.bf16.gmra.mxu0 %v1009
        %v1108 = vpop.f32.mrf.mxu0
        %v1109 = vadd.f32 %v1056, %v1108
        %v1110 = vpop.f32.mrf.mxu0
        %v1111 = vadd.f32 %v1058, %v1110
        %v1112 = vpop.f32.mrf.mxu0
        %v1113 = vadd.f32 %v1060, %v1112
        %v1114 = vpop.f32.mrf.mxu0
        %v1115 = vadd.f32 %v1062, %v1114
        %1116 = vdwg.mxu0
        %v1117 = vadd.f32 %v1099, %v1101
        %1118 = vadd.xlane.f32.xlu0 %v1117
        %v1119 = vpop.xlane.xlu0 %1118
        %v1120 = vadd.f32 %v1103, %v1105
        %1121 = vadd.xlane.f32.xlu0 %v1120
        %v1122 = vpop.xlane.xlu0 %1121
        %v1123 = vadd.f32 %v1109, %v1111
        %1124 = vadd.xlane.f32.xlu0 %v1123
        %v1125 = vpop.xlane.xlu0 %1124
        %v1126 = vadd.f32 %v1113, %v1115
        %1127 = vadd.xlane.f32.xlu0 %v1126
        %v1128 = vpop.xlane.xlu0 %1127
        %v1129 = vmul.f32 %v1119, %v531
        %v1130 = vmul.f32 %v1122, %v531
        %v1131 = vmul.f32 %v1125, %v531
        %v1132 = vmul.f32 %v1128, %v531
        %v1133 = vsub.f32 %v1099, %v1129
        %v1134 = vsub.f32 %v1101, %v1129
        %v1135 = vsub.f32 %v1103, %v1130
        %v1136 = vsub.f32 %v1105, %v1130
        %v1137 = vsub.f32 %v1109, %v1131
        %v1138 = vsub.f32 %v1111, %v1131
        %v1139 = vsub.f32 %v1113, %v1132
        %v1140 = vsub.f32 %v1115, %v1132
        %v1141 = vmul.f32 %v1133, %v1133
        %v1142 = vmul.f32 %v1134, %v1134
        %v1143 = vmul.f32 %v1135, %v1135
        %v1144 = vmul.f32 %v1136, %v1136
        %v1145 = vmul.f32 %v1137, %v1137
        %v1146 = vmul.f32 %v1138, %v1138
        %v1147 = vmul.f32 %v1139, %v1139
        %v1148 = vmul.f32 %v1140, %v1140
        %v1149 = vadd.f32 %v1141, %v1142
        %1150 = vadd.xlane.f32.xlu0 %v1149
        %v1151 = vpop.xlane.xlu0 %1150
        %v1152 = vadd.f32 %v1143, %v1144
        %1153 = vadd.xlane.f32.xlu0 %v1152
        %v1154 = vpop.xlane.xlu0 %1153
        %v1155 = vadd.f32 %v1145, %v1146
        %1156 = vadd.xlane.f32.xlu0 %v1155
        %v1157 = vpop.xlane.xlu0 %1156
        %v1158 = vadd.f32 %v1147, %v1148
        %1159 = vadd.xlane.f32.xlu0 %v1158
        %v1160 = vpop.xlane.xlu0 %1159
        %v1161 = vmul.f32 %v1151, %v531
        %v1162 = vmul.f32 %v1154, %v531
        %v1163 = vmul.f32 %v1157, %v531
        %v1164 = vmul.f32 %v1160, %v531
        %v1165 = vadd.f32 %v1161, 1e-05
        %v1166 = vadd.f32 %v1162, 1e-05
        %v1167 = vadd.f32 %v1163, 1e-05
        %v1168 = vadd.f32 %v1164, 1e-05
        %v1169 = vrsqrt.pop %v1165
        %v1170 = vrsqrt.pop %v1166
        %v1171 = vrsqrt.pop %v1167
        %v1172 = vrsqrt.pop %v1168
        %v1173 = vmul.f32 %v1133, %v1169
        %v1174 = vmul.f32 %v1134, %v1169
        %v1175 = vmul.f32 %v1135, %v1170
        %v1176 = vmul.f32 %v1136, %v1170
        %v1177 = vmul.f32 %v1137, %v1171
        %v1178 = vmul.f32 %v1138, %v1171
        %v1179 = vmul.f32 %v1139, %v1172
        %v1180 = vmul.f32 %v1140, %v1172
        %vm1181 = vcmp.gt.f32.partialorder %v1173, 0.0
        %vm1182 = vcmp.gt.f32.partialorder %v1174, 0.0
        %vm1183 = vcmp.gt.f32.partialorder %v1175, 0.0
        %vm1184 = vcmp.gt.f32.partialorder %v1176, 0.0
        %vm1185 = vcmp.gt.f32.partialorder %v1177, 0.0
        %vm1186 = vcmp.gt.f32.partialorder %v1178, 0.0
        %vm1187 = vcmp.gt.f32.partialorder %v1179, 0.0
        %vm1188 = vcmp.gt.f32.partialorder %v1180, 0.0
        %v1189 = vld [vmem:[#allocation3] sm:$0x1]
        %v1191 = vlaneseq
        %v1192 = vshrl.u32 %v1191, 7
        %v1193 = vsub.s32 0, %v1192
        %v1194 = vrot.slane %v1189, %v1193
        %1195 = vset.pattern.permute.xlu0 0
        %1196 = vperm.xlu0 %1195, %v1194
        %v1197 = vpop.permute.xlu0 %1196
        %v1199 = vmul.f32 %v1197, %v1173
        %v1200 = vmul.f32 %v1197, %v1174
        %v1201 = vmul.f32 %v1197, %v1175
        %v1202 = vmul.f32 %v1197, %v1176
        %v1203 = vmul.f32 %v1197, %v1177
        %v1204 = vmul.f32 %v1197, %v1178
        %v1205 = vmul.f32 %v1197, %v1179
        %v1206 = vmul.f32 %v1197, %v1180
        %v1207 = vsel %vm1181, %v1173, %v1199
        %v1208 = vsel %vm1182, %v1174, %v1200
        %v1209 = vsel %vm1183, %v1175, %v1201
        %v1210 = vsel %vm1184, %v1176, %v1202
        %v1211 = vsel %vm1185, %v1177, %v1203
        %v1212 = vsel %vm1186, %v1178, %v1204
        %v1213 = vsel %vm1187, %v1179, %v1205
        %v1214 = vsel %vm1188, %v1180, %v1206
        %1215 = vst [vmem:[%s273] sm:$0xff] %v1207
        %1216 = vst [vmem:[%s273 + $0x8] sm:$0xff] %v1208
        %1217 = vst [vmem:[%s273 + $0x10] sm:$0xff] %v1209
        %1218 = vst [vmem:[%s273 + $0x18] sm:$0xff] %v1210
        %1219 = vst [vmem:[%s273 + $0x20] sm:$0xff] %v1211
        %1220 = vst [vmem:[%s273 + $0x28] sm:$0xff] %v1212
        %1221 = vst [vmem:[%s273 + $0x30] sm:$0xff] %v1213
        %1222 = vst [vmem:[%s273 + $0x38] sm:$0xff] %v1214
        %s1223 = sand.u32 %s145, 1
        %s1224 = scalar_lea.sflag [#allocation6], %s1223
        %s1225 = sand.u32 %s145, 1
        %s1226 = smul.addr %s1225, 64
        %s1227 = scalar_lea.vmem [#allocation10], %s1226
        // Predicated region
        $region53: #{tpu_custom_call.1} parent=39 // pred_check
          %p1228 = pneg %p155
        $region54: #{tpu_custom_call.1} parent=39 // pred_check_branch
          %1230 = sbr.rel (%p1228) target = $region56
        $region55: #{tpu_custom_call.1} parent=39 // pred_region
          %s1231 = smul.u32 4, %s27
          %s1233 = ssub.s32 1024, 1024
          %1234 = vsyncadd %s1224, %s1233
          %s1235 = smul.addr %s1231, 2
          %s1236 = smul.addr %s1235, 128
          %s1237 = scalar_lea.hbm %s5, %s1236
          %s1238 = sshll.u32 %s1227, 4
          %s1239 = int_to_ptr.vmem [resolvable:$true] %s1238
          %1244 = dma.vmem_to_hbm [thread:$0]  %s1239, 1024, %s1237, %s1224, 256, 256, 16
        $region56: #{tpu_custom_call.1} parent=39 // pred_fallthru
          _
      $region40: #{tpu_custom_call.1} parent=5 // pred_fallthru
        _
      %p1245 = scmp.le.s32.totalorder 2, %s22
      // Predicated region
      $region57: #{tpu_custom_call.1} parent=5 // pred_check
        %p1246 = pneg %p1245
      $region58: #{tpu_custom_call.1} parent=5 // pred_check_branch
        %1248 = sbr.rel (%p1246) target = $region60
      $region59: #{tpu_custom_call.1} parent=5 // pred_region
        %s1249 = ssub.s32 %s22, 2
        // Predicated region
        $region61: #{tpu_custom_call.1} parent=59 // pred_check
          %p1250 = pneg %p161
        $region62: #{tpu_custom_call.1} parent=59 // pred_check_branch
          %1252 = sbr.rel (%p1250) target = $region64
        $region63: #{tpu_custom_call.1} parent=59 // pred_region
          %s1253 = sand.u32 %s146, 1
          %s1254 = scalar_lea.sflag [#allocation6], %s1253
          %s1255 = sand.u32 %s146, 1
          %s1256 = smul.addr %s1255, 64
          %s1257 = scalar_lea.vmem [#allocation10], %s1256
          %1258 = dma.done %s1254, 1024
        $region64: #{tpu_custom_call.1} parent=59 // pred_fallthru
          _
      $region60: #{tpu_custom_call.1} parent=5 // pred_fallthru
        _
    $region6: #{tpu_custom_call.1} parent=1 // loop_footer
      %s26 = sadd.s32 1, %s22
    $region7: #{tpu_custom_call.1} parent=1 // loop_footer_branch
      %21 = sbr.rel target = $region3
    $region8: #{tpu_custom_call.1} parent=1 // loop_exit
      _
    %1259 = vsyncpa [#allocation5], 1
    %s1260 = scalar_lea.sflag [#allocation5], 1
    %1261 = vsyncpa %s1260, 1
    %1262 = vsyncpa [#allocation8], 1
    %1263 = vsyncpa [#allocation6], 1
    %s1264 = scalar_lea.sflag [#allocation6], 1
    %1265 = vsyncpa %s1264, 1

</llo_original>
